<compile_context>
chip_gen: v6e
topology: v6e:2x2x1
jax: 0.10.0
libtpu: 0.0.40
codegen_flags: <defaults>
</compile_context>

<pallas_src>
import functools

import jax
import jax.numpy as jnp
from jax.experimental import pallas as pl
from jax.experimental.pallas import tpu as pltpu


# ----------------------------- config (small, synthetic) -----------------------------
BATCH = 2
SEQ = 8
HIDDEN = 32
NUM_HEADS = 4
HEAD_DIM = HIDDEN // NUM_HEADS
INTERMEDIATE = 64
LN_EPS = 1e-5


def _layer_norm(x, gamma, beta, eps):
    # x: (S, H), gamma/beta: (1, H).  Matches torch.nn.LayerNorm (biased variance).
    mean = jnp.mean(x, axis=-1, keepdims=True)
    xc = x - mean
    var = jnp.mean(xc * xc, axis=-1, keepdims=True)
    inv = jax.lax.rsqrt(var + eps)
    return xc * inv * gamma + beta


def _erf(x):
    # Abramowitz & Stegun 7.1.26 rational approximation, |err| <= 1.5e-7.
    # Uses only abs/where/exp/mul/add/div -> guaranteed Mosaic lowering.
    a1, a2, a3, a4, a5 = 0.254829592, -0.284496736, 1.421413741, -1.453152027, 1.061405429
    p_ = 0.3275911
    ax = jnp.abs(x)
    t = 1.0 / (1.0 + p_ * ax)
    poly = ((((a5 * t + a4) * t + a3) * t + a2) * t + a1) * t
    y = 1.0 - poly * jnp.exp(-ax * ax)
    return jnp.where(x < 0, -y, y)


def _gelu_exact(x):
    # Exact (erf-based) GELU, matching HF hidden_act="gelu".
    return 0.5 * x * (1.0 + _erf(x * 0.7071067811865476))


def encoder_layer_kernel(
    x_ref, wqkv_ref, wo_ref, w1_ref, w2_ref, vec_ref, out_ref,
    *, seq, hidden, num_heads, head_dim, inter, eps,
):
    del seq  # implied by the block shape
    x = x_ref[...]                      # (S, H) f32 -- one batch element per grid step
    vecs = vec_ref[...]                 # (8, W) packed bias / LayerNorm slab (f32)

    bqkv = vecs[0:1, : 3 * hidden]      # (1, 3H) -- q-part already pre-scaled
    b1 = vecs[1:2, : inter]             # (1, I)
    bo = vecs[2:3, : hidden]            # (1, H)
    ln1_g = vecs[3:4, : hidden]
    ln1_b = vecs[4:5, : hidden]
    ln2_g = vecs[5:6, : hidden]
    ln2_b = vecs[6:7, : hidden]
    b2 = vecs[7:8, : hidden]

    # ---------------- Wav2Vec2Attention (per-batch self-attention, no mask) ----------------
    # Fused QKV projection: bf16 operands, f32 accumulation, one bias add.
    x_bf = x.astype(jnp.bfloat16)
    qkv = jnp.dot(x_bf, wqkv_ref[...], preferred_element_type=jnp.float32) + bqkv

    # Split q/k/v on H boundaries (128-aligned at real dims; sub-tile at toy H=32).
    q = qkv[:, 0:hidden].astype(jnp.bfloat16)
    k = qkv[:, hidden:2 * hidden].astype(jnp.bfloat16)
    v = qkv[:, 2 * hidden:3 * hidden].astype(jnp.bfloat16)

    ctx_heads = []
    for h in range(num_heads):          # static loop, num_heads is small
        lo = h * head_dim
        qh = q[:, lo: lo + head_dim]                                     # (S, d) bf16
        kh = k[:, lo: lo + head_dim]
        vh = v[:, lo: lo + head_dim]

        # scores without materializing kh.T: contract dim 1 of both operands.
        s = jax.lax.dot_general(
            qh, kh, (((1,), (1,)), ((), ())),
            preferred_element_type=jnp.float32,
        )                                                                # (S, S) f32
        s = s - jnp.max(s, axis=-1, keepdims=True)
        p = jnp.exp(s)
        p = p / jnp.sum(p, axis=-1, keepdims=True)   # exact divide (keeps bf16 error budget)

        ctx_heads.append(
            jnp.dot(p.astype(jnp.bfloat16), vh, preferred_element_type=jnp.float32)
        )                                                                # (S, d) f32

    # Single out-projection with K=H instead of per-head K=head_dim accumulation.
    ctx = jnp.concatenate(ctx_heads, axis=-1)                            # (S, H)
    attn_out = jnp.dot(ctx.astype(jnp.bfloat16), wo_ref[...],
                       preferred_element_type=jnp.float32) + bo

    # dropout (eval) -> identity; residual + LayerNorm (f32)
    h1 = _layer_norm(x + attn_out, ln1_g, ln1_b, eps)

    # ---------------- Wav2Vec2FeedForward ----------------
    ff = jnp.dot(h1.astype(jnp.bfloat16), w1_ref[...],
                 preferred_element_type=jnp.float32) + b1
    ff = _gelu_exact(ff)
    ff = jnp.dot(ff.astype(jnp.bfloat16), w2_ref[...],
                 preferred_element_type=jnp.float32) + b2

    h2 = _layer_norm(h1 + ff, ln2_g, ln2_b, eps)
    out_ref[...] = h2.astype(out_ref.dtype)


def pack_operands(p):
    """Host-side fusion/packing of weights for the kernel (bf16 weights, f32 vectors)."""
    H, I = HIDDEN, INTERMEDIATE
    scale = HEAD_DIM ** -0.5
    # HF applies the scale AFTER q_proj (including bias): (x@Wq + bq) * scale.
    # Folding it into Wq and bq is mathematically identical.
    wqkv = jnp.concatenate([p["wq"] * scale, p["wk"], p["wv"]], axis=1)   # (H, 3H)
    bqkv = jnp.concatenate([p["bq"] * scale, p["bk"], p["bv"]], axis=1)   # (1, 3H) f32

    W = max(3 * H, I)

    def row(v):
        v = jnp.reshape(v, (-1,))
        return jnp.pad(v, (0, W - v.shape[0]))

    vec = jnp.stack(
        [row(bqkv), row(p["b1"]), row(p["bo"]),
         row(p["ln1_g"]), row(p["ln1_b"]),
         row(p["ln2_g"]), row(p["ln2_b"]), row(p["b2"])],
        axis=0,
    ).astype(jnp.float32)                                                 # (8, W)

    return (wqkv.astype(jnp.bfloat16),
            p["wo"].astype(jnp.bfloat16),
            p["w1"].astype(jnp.bfloat16),
            p["w2"].astype(jnp.bfloat16),
            vec)


def wav2vec2_encoder_layer(x, params):
    B, S, H = x.shape
    I = params["w1"].shape[1]
    W = max(3 * H, I)
    nh, hd = NUM_HEADS, H // NUM_HEADS

    wqkv, wo, w1, w2, vec = pack_operands(params)

    kernel = functools.partial(
        encoder_layer_kernel,
        seq=S, hidden=H, num_heads=nh, head_dim=hd, inter=I, eps=LN_EPS,
    )

    # Constant block index -> weights DMA'd once, resident across all grid steps.
    weight_spec = lambda shape: pl.BlockSpec(shape, lambda b: (0, 0))

    flops = int(
        2 * B * S * H * (3 * H)        # fused QKV projection
        + 4 * B * nh * S * S * hd      # scores + P.V
        + 2 * B * S * H * H            # out projection
        + 4 * B * S * H * I            # feed-forward (W1 + W2)
    )
    transcendentals = int(B * nh * S * S + 2 * B * S * I)   # softmax exp + gelu exp
    bytes_accessed = int(
        x.size * 4 + B * S * H * 4
        + (wqkv.size + wo.size + w1.size + w2.size) * 2
        + vec.size * 4
    )

    out = pl.pallas_call(
        kernel,
        out_shape=jax.ShapeDtypeStruct((B, S, H), jnp.float32),
        grid=(B,),  # batch axis: independent -> "parallel" (v7x dual-TC / megacore)
        in_specs=[
            pl.BlockSpec((None, S, H), lambda b: (b, 0, 0)),   # hidden_states (per batch)
            weight_spec((H, 3 * H)),   # fused q|k|v weights (q pre-scaled), bf16
            weight_spec((H, H)),       # out_proj weight, bf16
            weight_spec((H, I)),       # intermediate_dense weight, bf16
            weight_spec((I, H)),       # output_dense weight, bf16
            weight_spec((8, W)),       # packed biases + LayerNorm gamma/beta, f32
        ],
        out_specs=pl.BlockSpec((None, S, H), lambda b: (b, 0, 0)),
        compiler_params=pltpu.CompilerParams(dimension_semantics=("parallel",)),
        cost_estimate=pl.CostEstimate(
            flops=flops, transcendentals=transcendentals, bytes_accessed=bytes_accessed),
    )(x, wqkv, wo, w1, w2, vec)

    return out


# ----------------------------- pure-JAX reference -----------------------------
def reference(x, p):
    scale = HEAD_DIM ** -0.5
    B, S, H = x.shape

    def ln(y, g, b):
        m = jnp.mean(y, axis=-1, keepdims=True)
        yc = y - m
        v = jnp.mean(yc * yc, axis=-1, keepdims=True)
        return yc * jax.lax.rsqrt(v + LN_EPS) * g + b

    q = (x @ p["wq"] + p["bq"]) * scale
    k = x @ p["wk"] + p["bk"]
    v = x @ p["wv"] + p["bv"]
    q = q.reshape(B, S, NUM_HEADS, HEAD_DIM)
    k = k.reshape(B, S, NUM_HEADS, HEAD_DIM)
    v = v.reshape(B, S, NUM_HEADS, HEAD_DIM)
    s = jnp.einsum("bqhd,bkhd->bhqk", q, k)
    pw = jax.nn.softmax(s, axis=-1)
    ctx = jnp.einsum("bhqk,bkhd->bqhd", pw, v).reshape(B, S, H)
    attn_out = ctx @ p["wo"] + p["bo"]
    h1 = ln(x + attn_out, p["ln1_g"], p["ln1_b"])
    ff = jax.nn.gelu(h1 @ p["w1"] + p["b1"], approximate=False) @ p["w2"] + p["b2"]
    return ln(h1 + ff, p["ln2_g"], p["ln2_b"])


def init_params(key):
    ks = jax.random.split(key, 8)
    n = lambda k, shape: (0.02 * jax.random.normal(k, shape)).astype(jnp.float32)
    H, I = HIDDEN, INTERMEDIATE
    return {
        "wq": n(ks[0], (H, H)), "bq": jnp.zeros((1, H), jnp.float32),
        "wk": n(ks[1], (H, H)), "bk": jnp.zeros((1, H), jnp.float32),
        "wv": n(ks[2], (H, H)), "bv": jnp.zeros((1, H), jnp.float32),
        "wo": n(ks[3], (H, H)), "bo": jnp.zeros((1, H), jnp.float32),
        "ln1_g": jnp.ones((1, H), jnp.float32), "ln1_b": jnp.zeros((1, H), jnp.float32),
        "w1": n(ks[4], (H, I)), "b1": 0.01 * jnp.ones((1, I), jnp.float32),
        "w2": n(ks[5], (I, H)), "b2": 0.01 * jnp.ones((1, H), jnp.float32),
        "ln2_g": jnp.ones((1, H), jnp.float32), "ln2_b": jnp.zeros((1, H), jnp.float32),
    }


if __name__ == "__main__":
    key = jax.random.PRNGKey(0)
    k_x, k_p = jax.random.split(key)
    x = jax.random.normal(k_x, (BATCH, SEQ, HIDDEN), dtype=jnp.float32)
    params = init_params(k_p)

    out = wav2vec2_encoder_layer(x, params)
    out = jax.block_until_ready(out)

    ref = reference(x, params)
    assert out.shape == (BATCH, SEQ, HIDDEN)
    assert jnp.allclose(out, ref, atol=2e-3, rtol=2e-3), "mismatch vs pure-JAX reference"

    print("KERNEL_OK")
</pallas_src>

<mosaic_0001>
module attributes {stable_mosaic.version = 11 : i64} {
  func.func @encoder_layer_kernel(%arg0: i32, %arg1: memref<1x8x32xf32, #tpu.memory_space<vmem>>, %arg2: memref<32x96xbf16, #tpu.memory_space<vmem>>, %arg3: memref<32x32xbf16, #tpu.memory_space<vmem>>, %arg4: memref<32x64xbf16, #tpu.memory_space<vmem>>, %arg5: memref<64x32xbf16, #tpu.memory_space<vmem>>, %arg6: memref<8x96xf32, #tpu.memory_space<vmem>>, %arg7: memref<1x8x32xf32, #tpu.memory_space<vmem>>) attributes {dimension_semantics = [#tpu.dimension_semantics<parallel>], iteration_bounds = array<i64: 2>, scalar_prefetch = 0 : i64, scratch_operands = 0 : i64, tpu.core_type = #tpu.core_type<tc>, window_params = [{transform_indices = @transform_0, window_bounds = array<i64: 1, 8, 32>}, {pipeline_mode = #tpu.pipeline_mode<synchronous>, transform_indices = @transform_1, window_bounds = array<i64: 32, 96>}, {pipeline_mode = #tpu.pipeline_mode<synchronous>, transform_indices = @transform_2, window_bounds = array<i64: 32, 32>}, {pipeline_mode = #tpu.pipeline_mode<synchronous>, transform_indices = @transform_3, window_bounds = array<i64: 32, 64>}, {pipeline_mode = #tpu.pipeline_mode<synchronous>, transform_indices = @transform_4, window_bounds = array<i64: 64, 32>}, {pipeline_mode = #tpu.pipeline_mode<synchronous>, transform_indices = @transform_5, window_bounds = array<i64: 8, 96>}, {transform_indices = @transform_6, window_bounds = array<i64: 1, 8, 32>}]} {
    %c0 = arith.constant 0 : index
    %c0_0 = arith.constant 0 : index
    %c0_1 = arith.constant 0 : index
    %0 = vector.load %arg1[%c0, %c0_0, %c0_1] : memref<1x8x32xf32, #tpu.memory_space<vmem>>, vector<1x8x32xf32>
    %1 = vector.shape_cast %0 : vector<1x8x32xf32> to vector<8x32xf32>
    %c0_2 = arith.constant 0 : index
    %c0_3 = arith.constant 0 : index
    %2 = vector.load %arg6[%c0_2, %c0_3] : memref<8x96xf32, #tpu.memory_space<vmem>>, vector<8x96xf32>
    %3 = vector.extract_strided_slice %2 {offsets = [0, 0], sizes = [1, 96], strides = [1, 1]} : vector<8x96xf32> to vector<1x96xf32>
    %4 = vector.extract_strided_slice %2 {offsets = [1, 0], sizes = [1, 64], strides = [1, 1]} : vector<8x96xf32> to vector<1x64xf32>
    %5 = vector.extract_strided_slice %2 {offsets = [2, 0], sizes = [1, 32], strides = [1, 1]} : vector<8x96xf32> to vector<1x32xf32>
    %6 = vector.extract_strided_slice %2 {offsets = [3, 0], sizes = [1, 32], strides = [1, 1]} : vector<8x96xf32> to vector<1x32xf32>
    %7 = vector.extract_strided_slice %2 {offsets = [4, 0], sizes = [1, 32], strides = [1, 1]} : vector<8x96xf32> to vector<1x32xf32>
    %8 = vector.extract_strided_slice %2 {offsets = [5, 0], sizes = [1, 32], strides = [1, 1]} : vector<8x96xf32> to vector<1x32xf32>
    %9 = vector.extract_strided_slice %2 {offsets = [6, 0], sizes = [1, 32], strides = [1, 1]} : vector<8x96xf32> to vector<1x32xf32>
    %10 = vector.extract_strided_slice %2 {offsets = [7, 0], sizes = [1, 32], strides = [1, 1]} : vector<8x96xf32> to vector<1x32xf32>
    %11 = arith.truncf %1 : vector<8x32xf32> to vector<8x32xbf16>
    %c0_4 = arith.constant 0 : index
    %c0_5 = arith.constant 0 : index
    %12 = vector.load %arg2[%c0_4, %c0_5] : memref<32x96xbf16, #tpu.memory_space<vmem>>, vector<32x96xbf16>
    %cst = arith.constant dense<0.000000e+00> : vector<8x96xf32>
    %13 = tpu.matmul %11, %12, %cst {dimension_numbers = #tpu.dot_dimension_numbers<[1], [0], [0], [1], [0, 0, 1, 1], [], []>} : vector<8x32xbf16>, vector<32x96xbf16>, vector<8x96xf32> -> vector<8x96xf32>
    %14 = vector.broadcast %3 : vector<1x96xf32> to vector<8x96xf32>
    %15 = arith.addf %13, %14 : vector<8x96xf32>
    %16 = vector.extract_strided_slice %15 {offsets = [0, 0], sizes = [8, 32], strides = [1, 1]} : vector<8x96xf32> to vector<8x32xf32>
    %17 = arith.truncf %16 : vector<8x32xf32> to vector<8x32xbf16>
    %18 = vector.extract_strided_slice %15 {offsets = [0, 32], sizes = [8, 32], strides = [1, 1]} : vector<8x96xf32> to vector<8x32xf32>
    %19 = arith.truncf %18 : vector<8x32xf32> to vector<8x32xbf16>
    %20 = vector.extract_strided_slice %15 {offsets = [0, 64], sizes = [8, 32], strides = [1, 1]} : vector<8x96xf32> to vector<8x32xf32>
    %21 = arith.truncf %20 : vector<8x32xf32> to vector<8x32xbf16>
    %22 = vector.extract_strided_slice %17 {offsets = [0, 0], sizes = [8, 8], strides = [1, 1]} : vector<8x32xbf16> to vector<8x8xbf16>
    %23 = vector.extract_strided_slice %19 {offsets = [0, 0], sizes = [8, 8], strides = [1, 1]} : vector<8x32xbf16> to vector<8x8xbf16>
    %24 = vector.extract_strided_slice %21 {offsets = [0, 0], sizes = [8, 8], strides = [1, 1]} : vector<8x32xbf16> to vector<8x8xbf16>
    %cst_6 = arith.constant dense<0.000000e+00> : vector<8x8xf32>
    %25 = tpu.matmul %22, %23, %cst_6 {dimension_numbers = #tpu.dot_dimension_numbers<[1], [1], [0], [0], [0, 0, 1, 0], [], []>} : vector<8x8xbf16>, vector<8x8xbf16>, vector<8x8xf32> -> vector<8x8xf32>
    %cst_7 = arith.constant dense<0xFF800000> : vector<8xf32>
    %26 = vector.multi_reduction <maximumf>, %25, %cst_7 [1] : vector<8x8xf32> to vector<8xf32>
    %27 = vector.shape_cast %26 : vector<8xf32> to vector<8x1xf32>
    %28 = vector.broadcast %27 : vector<8x1xf32> to vector<8x8xf32>
    %29 = arith.subf %25, %28 : vector<8x8xf32>
    %30 = math.exp %29 : vector<8x8xf32>
    %cst_8 = arith.constant dense<0.000000e+00> : vector<8xf32>
    %31 = vector.multi_reduction <add>, %30, %cst_8 [1] : vector<8x8xf32> to vector<8xf32>
    %32 = vector.shape_cast %31 : vector<8xf32> to vector<8x1xf32>
    %33 = vector.broadcast %32 : vector<8x1xf32> to vector<8x8xf32>
    %34 = arith.divf %30, %33 : vector<8x8xf32>
    %35 = arith.truncf %34 : vector<8x8xf32> to vector<8x8xbf16>
    %cst_9 = arith.constant dense<0.000000e+00> : vector<8x8xf32>
    %36 = tpu.matmul %35, %24, %cst_9 {dimension_numbers = #tpu.dot_dimension_numbers<[1], [0], [0], [1], [0, 0, 1, 1], [], []>} : vector<8x8xbf16>, vector<8x8xbf16>, vector<8x8xf32> -> vector<8x8xf32>
    %37 = vector.extract_strided_slice %17 {offsets = [0, 8], sizes = [8, 8], strides = [1, 1]} : vector<8x32xbf16> to vector<8x8xbf16>
    %38 = vector.extract_strided_slice %19 {offsets = [0, 8], sizes = [8, 8], strides = [1, 1]} : vector<8x32xbf16> to vector<8x8xbf16>
    %39 = vector.extract_strided_slice %21 {offsets = [0, 8], sizes = [8, 8], strides = [1, 1]} : vector<8x32xbf16> to vector<8x8xbf16>
    %cst_10 = arith.constant dense<0.000000e+00> : vector<8x8xf32>
    %40 = tpu.matmul %37, %38, %cst_10 {dimension_numbers = #tpu.dot_dimension_numbers<[1], [1], [0], [0], [0, 0, 1, 0], [], []>} : vector<8x8xbf16>, vector<8x8xbf16>, vector<8x8xf32> -> vector<8x8xf32>
    %cst_11 = arith.constant dense<0xFF800000> : vector<8xf32>
    %41 = vector.multi_reduction <maximumf>, %40, %cst_11 [1] : vector<8x8xf32> to vector<8xf32>
    %42 = vector.shape_cast %41 : vector<8xf32> to vector<8x1xf32>
    %43 = vector.broadcast %42 : vector<8x1xf32> to vector<8x8xf32>
    %44 = arith.subf %40, %43 : vector<8x8xf32>
    %45 = math.exp %44 : vector<8x8xf32>
    %cst_12 = arith.constant dense<0.000000e+00> : vector<8xf32>
    %46 = vector.multi_reduction <add>, %45, %cst_12 [1] : vector<8x8xf32> to vector<8xf32>
    %47 = vector.shape_cast %46 : vector<8xf32> to vector<8x1xf32>
    %48 = vector.broadcast %47 : vector<8x1xf32> to vector<8x8xf32>
    %49 = arith.divf %45, %48 : vector<8x8xf32>
    %50 = arith.truncf %49 : vector<8x8xf32> to vector<8x8xbf16>
    %cst_13 = arith.constant dense<0.000000e+00> : vector<8x8xf32>
    %51 = tpu.matmul %50, %39, %cst_13 {dimension_numbers = #tpu.dot_dimension_numbers<[1], [0], [0], [1], [0, 0, 1, 1], [], []>} : vector<8x8xbf16>, vector<8x8xbf16>, vector<8x8xf32> -> vector<8x8xf32>
    %52 = vector.extract_strided_slice %17 {offsets = [0, 16], sizes = [8, 8], strides = [1, 1]} : vector<8x32xbf16> to vector<8x8xbf16>
    %53 = vector.extract_strided_slice %19 {offsets = [0, 16], sizes = [8, 8], strides = [1, 1]} : vector<8x32xbf16> to vector<8x8xbf16>
    %54 = vector.extract_strided_slice %21 {offsets = [0, 16], sizes = [8, 8], strides = [1, 1]} : vector<8x32xbf16> to vector<8x8xbf16>
    %cst_14 = arith.constant dense<0.000000e+00> : vector<8x8xf32>
    %55 = tpu.matmul %52, %53, %cst_14 {dimension_numbers = #tpu.dot_dimension_numbers<[1], [1], [0], [0], [0, 0, 1, 0], [], []>} : vector<8x8xbf16>, vector<8x8xbf16>, vector<8x8xf32> -> vector<8x8xf32>
    %cst_15 = arith.constant dense<0xFF800000> : vector<8xf32>
    %56 = vector.multi_reduction <maximumf>, %55, %cst_15 [1] : vector<8x8xf32> to vector<8xf32>
    %57 = vector.shape_cast %56 : vector<8xf32> to vector<8x1xf32>
    %58 = vector.broadcast %57 : vector<8x1xf32> to vector<8x8xf32>
    %59 = arith.subf %55, %58 : vector<8x8xf32>
    %60 = math.exp %59 : vector<8x8xf32>
    %cst_16 = arith.constant dense<0.000000e+00> : vector<8xf32>
    %61 = vector.multi_reduction <add>, %60, %cst_16 [1] : vector<8x8xf32> to vector<8xf32>
    %62 = vector.shape_cast %61 : vector<8xf32> to vector<8x1xf32>
    %63 = vector.broadcast %62 : vector<8x1xf32> to vector<8x8xf32>
    %64 = arith.divf %60, %63 : vector<8x8xf32>
    %65 = arith.truncf %64 : vector<8x8xf32> to vector<8x8xbf16>
    %cst_17 = arith.constant dense<0.000000e+00> : vector<8x8xf32>
    %66 = tpu.matmul %65, %54, %cst_17 {dimension_numbers = #tpu.dot_dimension_numbers<[1], [0], [0], [1], [0, 0, 1, 1], [], []>} : vector<8x8xbf16>, vector<8x8xbf16>, vector<8x8xf32> -> vector<8x8xf32>
    %67 = vector.extract_strided_slice %17 {offsets = [0, 24], sizes = [8, 8], strides = [1, 1]} : vector<8x32xbf16> to vector<8x8xbf16>
    %68 = vector.extract_strided_slice %19 {offsets = [0, 24], sizes = [8, 8], strides = [1, 1]} : vector<8x32xbf16> to vector<8x8xbf16>
    %69 = vector.extract_strided_slice %21 {offsets = [0, 24], sizes = [8, 8], strides = [1, 1]} : vector<8x32xbf16> to vector<8x8xbf16>
    %cst_18 = arith.constant dense<0.000000e+00> : vector<8x8xf32>
    %70 = tpu.matmul %67, %68, %cst_18 {dimension_numbers = #tpu.dot_dimension_numbers<[1], [1], [0], [0], [0, 0, 1, 0], [], []>} : vector<8x8xbf16>, vector<8x8xbf16>, vector<8x8xf32> -> vector<8x8xf32>
    %cst_19 = arith.constant dense<0xFF800000> : vector<8xf32>
    %71 = vector.multi_reduction <maximumf>, %70, %cst_19 [1] : vector<8x8xf32> to vector<8xf32>
    %72 = vector.shape_cast %71 : vector<8xf32> to vector<8x1xf32>
    %73 = vector.broadcast %72 : vector<8x1xf32> to vector<8x8xf32>
    %74 = arith.subf %70, %73 : vector<8x8xf32>
    %75 = math.exp %74 : vector<8x8xf32>
    %cst_20 = arith.constant dense<0.000000e+00> : vector<8xf32>
    %76 = vector.multi_reduction <add>, %75, %cst_20 [1] : vector<8x8xf32> to vector<8xf32>
    %77 = vector.shape_cast %76 : vector<8xf32> to vector<8x1xf32>
    %78 = vector.broadcast %77 : vector<8x1xf32> to vector<8x8xf32>
    %79 = arith.divf %75, %78 : vector<8x8xf32>
    %80 = arith.truncf %79 : vector<8x8xf32> to vector<8x8xbf16>
    %cst_21 = arith.constant dense<0.000000e+00> : vector<8x8xf32>
    %81 = tpu.matmul %80, %69, %cst_21 {dimension_numbers = #tpu.dot_dimension_numbers<[1], [0], [0], [1], [0, 0, 1, 1], [], []>} : vector<8x8xbf16>, vector<8x8xbf16>, vector<8x8xf32> -> vector<8x8xf32>
    %82 = tpu.concatenate %36, %51, %66, %81 in 1 : vector<8x8xf32>, vector<8x8xf32>, vector<8x8xf32>, vector<8x8xf32> -> vector<8x32xf32>
    %83 = arith.truncf %82 : vector<8x32xf32> to vector<8x32xbf16>
    %c0_22 = arith.constant 0 : index
    %c0_23 = arith.constant 0 : index
    %84 = vector.load %arg3[%c0_22, %c0_23] : memref<32x32xbf16, #tpu.memory_space<vmem>>, vector<32x32xbf16>
    %cst_24 = arith.constant dense<0.000000e+00> : vector<8x32xf32>
    %85 = tpu.matmul %83, %84, %cst_24 {dimension_numbers = #tpu.dot_dimension_numbers<[1], [0], [0], [1], [0, 0, 1, 1], [], []>} : vector<8x32xbf16>, vector<32x32xbf16>, vector<8x32xf32> -> vector<8x32xf32>
    %86 = vector.broadcast %5 : vector<1x32xf32> to vector<8x32xf32>
    %87 = arith.addf %85, %86 : vector<8x32xf32>
    %88 = arith.addf %1, %87 : vector<8x32xf32>
    %cst_25 = arith.constant dense<0.000000e+00> : vector<8xf32>
    %89 = vector.multi_reduction <add>, %88, %cst_25 [1] : vector<8x32xf32> to vector<8xf32>
    %90 = vector.shape_cast %89 : vector<8xf32> to vector<8x1xf32>
    %cst_26 = arith.constant 3.200000e+01 : f32
    %91 = vector.broadcast %cst_26 : f32 to vector<8x1xf32>
    %92 = arith.divf %90, %91 : vector<8x1xf32>
    %93 = vector.broadcast %92 : vector<8x1xf32> to vector<8x32xf32>
    %94 = arith.subf %88, %93 : vector<8x32xf32>
    %95 = arith.mulf %94, %94 : vector<8x32xf32>
    %cst_27 = arith.constant dense<0.000000e+00> : vector<8xf32>
    %96 = vector.multi_reduction <add>, %95, %cst_27 [1] : vector<8x32xf32> to vector<8xf32>
    %97 = vector.shape_cast %96 : vector<8xf32> to vector<8x1xf32>
    %cst_28 = arith.constant 3.200000e+01 : f32
    %98 = vector.broadcast %cst_28 : f32 to vector<8x1xf32>
    %99 = arith.divf %97, %98 : vector<8x1xf32>
    %cst_29 = arith.constant 9.99999974E-6 : f32
    %100 = vector.broadcast %cst_29 : f32 to vector<8x1xf32>
    %101 = arith.addf %99, %100 : vector<8x1xf32>
    %102 = math.rsqrt %101 : vector<8x1xf32>
    %103 = vector.broadcast %102 : vector<8x1xf32> to vector<8x32xf32>
    %104 = arith.mulf %94, %103 : vector<8x32xf32>
    %105 = vector.broadcast %6 : vector<1x32xf32> to vector<8x32xf32>
    %106 = arith.mulf %104, %105 : vector<8x32xf32>
    %107 = vector.broadcast %7 : vector<1x32xf32> to vector<8x32xf32>
    %108 = arith.addf %106, %107 : vector<8x32xf32>
    %109 = arith.truncf %108 : vector<8x32xf32> to vector<8x32xbf16>
    %c0_30 = arith.constant 0 : index
    %c0_31 = arith.constant 0 : index
    %110 = vector.load %arg4[%c0_30, %c0_31] : memref<32x64xbf16, #tpu.memory_space<vmem>>, vector<32x64xbf16>
    %cst_32 = arith.constant dense<0.000000e+00> : vector<8x64xf32>
    %111 = tpu.matmul %109, %110, %cst_32 {dimension_numbers = #tpu.dot_dimension_numbers<[1], [0], [0], [1], [0, 0, 1, 1], [], []>} : vector<8x32xbf16>, vector<32x64xbf16>, vector<8x64xf32> -> vector<8x64xf32>
    %112 = vector.broadcast %4 : vector<1x64xf32> to vector<8x64xf32>
    %113 = arith.addf %111, %112 : vector<8x64xf32>
    %cst_33 = arith.constant 5.000000e-01 : f32
    %114 = vector.broadcast %cst_33 : f32 to vector<8x64xf32>
    %115 = arith.mulf %114, %113 : vector<8x64xf32>
    %cst_34 = arith.constant 0.707106769 : f32
    %116 = vector.broadcast %cst_34 : f32 to vector<8x64xf32>
    %117 = arith.mulf %113, %116 : vector<8x64xf32>
    %118 = math.absf %117 : vector<8x64xf32>
    %cst_35 = arith.constant 0.327591091 : f32
    %119 = vector.broadcast %cst_35 : f32 to vector<8x64xf32>
    %120 = arith.mulf %119, %118 : vector<8x64xf32>
    %cst_36 = arith.constant 1.000000e+00 : f32
    %121 = vector.broadcast %cst_36 : f32 to vector<8x64xf32>
    %122 = arith.addf %121, %120 : vector<8x64xf32>
    %cst_37 = arith.constant 1.000000e+00 : f32
    %123 = vector.broadcast %cst_37 : f32 to vector<8x64xf32>
    %124 = arith.divf %123, %122 : vector<8x64xf32>
    %cst_38 = arith.constant 1.06140542 : f32
    %125 = vector.broadcast %cst_38 : f32 to vector<8x64xf32>
    %126 = arith.mulf %125, %124 : vector<8x64xf32>
    %cst_39 = arith.constant -1.45315206 : f32
    %127 = vector.broadcast %cst_39 : f32 to vector<8x64xf32>
    %128 = arith.addf %126, %127 : vector<8x64xf32>
    %129 = arith.mulf %128, %124 : vector<8x64xf32>
    %cst_40 = arith.constant 1.42141378 : f32
    %130 = vector.broadcast %cst_40 : f32 to vector<8x64xf32>
    %131 = arith.addf %129, %130 : vector<8x64xf32>
    %132 = arith.mulf %131, %124 : vector<8x64xf32>
    %cst_41 = arith.constant -0.284496725 : f32
    %133 = vector.broadcast %cst_41 : f32 to vector<8x64xf32>
    %134 = arith.addf %132, %133 : vector<8x64xf32>
    %135 = arith.mulf %134, %124 : vector<8x64xf32>
    %cst_42 = arith.constant 0.254829586 : f32
    %136 = vector.broadcast %cst_42 : f32 to vector<8x64xf32>
    %137 = arith.addf %135, %136 : vector<8x64xf32>
    %138 = arith.mulf %137, %124 : vector<8x64xf32>
    %cst_43 = arith.constant 0.000000e+00 : f32
    %139 = vector.broadcast %cst_43 : f32 to vector<8x64xf32>
    %140 = arith.subf %139, %118 : vector<8x64xf32>
    %141 = arith.mulf %140, %118 : vector<8x64xf32>
    %142 = math.exp %141 : vector<8x64xf32>
    %143 = arith.mulf %138, %142 : vector<8x64xf32>
    %cst_44 = arith.constant 1.000000e+00 : f32
    %144 = vector.broadcast %cst_44 : f32 to vector<8x64xf32>
    %145 = arith.subf %144, %143 : vector<8x64xf32>
    %cst_45 = arith.constant 0.000000e+00 : f32
    %146 = vector.broadcast %cst_45 : f32 to vector<8x64xf32>
    %147 = arith.cmpf olt, %117, %146 : vector<8x64xf32>
    %cst_46 = arith.constant 0.000000e+00 : f32
    %148 = vector.broadcast %cst_46 : f32 to vector<8x64xf32>
    %149 = arith.subf %148, %145 : vector<8x64xf32>
    %150 = arith.select %147, %149, %145 : vector<8x64xi1>, vector<8x64xf32>
    %cst_47 = arith.constant 1.000000e+00 : f32
    %151 = vector.broadcast %cst_47 : f32 to vector<8x64xf32>
    %152 = arith.addf %151, %150 : vector<8x64xf32>
    %153 = arith.mulf %115, %152 : vector<8x64xf32>
    %154 = arith.truncf %153 : vector<8x64xf32> to vector<8x64xbf16>
    %c0_48 = arith.constant 0 : index
    %c0_49 = arith.constant 0 : index
    %155 = vector.load %arg5[%c0_48, %c0_49] : memref<64x32xbf16, #tpu.memory_space<vmem>>, vector<64x32xbf16>
    %cst_50 = arith.constant dense<0.000000e+00> : vector<8x32xf32>
    %156 = tpu.matmul %154, %155, %cst_50 {dimension_numbers = #tpu.dot_dimension_numbers<[1], [0], [0], [1], [0, 0, 1, 1], [], []>} : vector<8x64xbf16>, vector<64x32xbf16>, vector<8x32xf32> -> vector<8x32xf32>
    %157 = vector.broadcast %10 : vector<1x32xf32> to vector<8x32xf32>
    %158 = arith.addf %156, %157 : vector<8x32xf32>
    %159 = arith.addf %108, %158 : vector<8x32xf32>
    %cst_51 = arith.constant dense<0.000000e+00> : vector<8xf32>
    %160 = vector.multi_reduction <add>, %159, %cst_51 [1] : vector<8x32xf32> to vector<8xf32>
    %161 = vector.shape_cast %160 : vector<8xf32> to vector<8x1xf32>
    %cst_52 = arith.constant 3.200000e+01 : f32
    %162 = vector.broadcast %cst_52 : f32 to vector<8x1xf32>
    %163 = arith.divf %161, %162 : vector<8x1xf32>
    %164 = vector.broadcast %163 : vector<8x1xf32> to vector<8x32xf32>
    %165 = arith.subf %159, %164 : vector<8x32xf32>
    %166 = arith.mulf %165, %165 : vector<8x32xf32>
    %cst_53 = arith.constant dense<0.000000e+00> : vector<8xf32>
    %167 = vector.multi_reduction <add>, %166, %cst_53 [1] : vector<8x32xf32> to vector<8xf32>
    %168 = vector.shape_cast %167 : vector<8xf32> to vector<8x1xf32>
    %cst_54 = arith.constant 3.200000e+01 : f32
    %169 = vector.broadcast %cst_54 : f32 to vector<8x1xf32>
    %170 = arith.divf %168, %169 : vector<8x1xf32>
    %cst_55 = arith.constant 9.99999974E-6 : f32
    %171 = vector.broadcast %cst_55 : f32 to vector<8x1xf32>
    %172 = arith.addf %170, %171 : vector<8x1xf32>
    %173 = math.rsqrt %172 : vector<8x1xf32>
    %174 = vector.broadcast %173 : vector<8x1xf32> to vector<8x32xf32>
    %175 = arith.mulf %165, %174 : vector<8x32xf32>
    %176 = vector.broadcast %8 : vector<1x32xf32> to vector<8x32xf32>
    %177 = arith.mulf %175, %176 : vector<8x32xf32>
    %178 = vector.broadcast %9 : vector<1x32xf32> to vector<8x32xf32>
    %179 = arith.addf %177, %178 : vector<8x32xf32>
    %c0_56 = arith.constant 0 : index
    %c0_57 = arith.constant 0 : index
    %c0_58 = arith.constant 0 : index
    %180 = vector.load %arg7[%c0_56, %c0_57, %c0_58] : memref<1x8x32xf32, #tpu.memory_space<vmem>>, vector<1x8x32xf32>
    %181 = vector.shape_cast %180 : vector<1x8x32xf32> to vector<8x32xf32>
    %182 = vector.shape_cast %179 : vector<8x32xf32> to vector<1x8x32xf32>
    tpu.vector_store %arg7[%c0_56, %c0_57, %c0_58], %182 {strides = array<i32>} : memref<1x8x32xf32, #tpu.memory_space<vmem>>, vector<1x8x32xf32>,
    return
  }
  func.func @transform_0(%arg0: i32) -> (i32, i32, i32) {
    %c0_i32 = arith.constant 0 : i32
    %c0_i32_0 = arith.constant 0 : i32
    %c0_i32_1 = arith.constant 0 : i32
    return %arg0, %c0_i32, %c0_i32_0 : i32, i32, i32
  }
  func.func @transform_1(%arg0: i32) -> (i32, i32) {
    %c0_i32 = arith.constant 0 : i32
    %c0_i32_0 = arith.constant 0 : i32
    %c0_i32_1 = arith.constant 0 : i32
    return %c0_i32, %c0_i32_0 : i32, i32
  }
  func.func @transform_2(%arg0: i32) -> (i32, i32) {
    %c0_i32 = arith.constant 0 : i32
    %c0_i32_0 = arith.constant 0 : i32
    %c0_i32_1 = arith.constant 0 : i32
    return %c0_i32, %c0_i32_0 : i32, i32
  }
  func.func @transform_3(%arg0: i32) -> (i32, i32) {
    %c0_i32 = arith.constant 0 : i32
    %c0_i32_0 = arith.constant 0 : i32
    %c0_i32_1 = arith.constant 0 : i32
    return %c0_i32, %c0_i32_0 : i32, i32
  }
  func.func @transform_4(%arg0: i32) -> (i32, i32) {
    %c0_i32 = arith.constant 0 : i32
    %c0_i32_0 = arith.constant 0 : i32
    %c0_i32_1 = arith.constant 0 : i32
    return %c0_i32, %c0_i32_0 : i32, i32
  }
  func.func @transform_5(%arg0: i32) -> (i32, i32) {
    %c0_i32 = arith.constant 0 : i32
    %c0_i32_0 = arith.constant 0 : i32
    %c0_i32_1 = arith.constant 0 : i32
    return %c0_i32, %c0_i32_0 : i32, i32
  }
  func.func @transform_6(%arg0: i32) -> (i32, i32, i32) {
    %c0_i32 = arith.constant 0 : i32
    %c0_i32_0 = arith.constant 0 : i32
    %c0_i32_1 = arith.constant 0 : i32
    return %arg0, %c0_i32, %c0_i32_0 : i32, i32, i32
  }
}

</mosaic_0001>

<llo_original>
// kernel: tpu_custom_call.1
$region0: #{tpu_custom_call.1}
  #allocation0 [shape = 'u32[]', space=smem, size = 0x4, offset = 0x4, fixed_abs, tag = 'smem constant byte address 0x4 - core index']
  #allocation1 [shape = 'u32[144,128]{1,0:T(1,128)}', space=vmem, size = 0x12000, scoped, tag = 'internal scratch']
  %s0 = inlined_call_operand.vmem [shape: f32[2,8,32], index: 0, kind: input, shape index: {}]
  %s1 = inlined_call_operand.vmem [shape: bf16[32,96], index: 1, kind: input, shape index: {}]
  %s2 = inlined_call_operand.vmem [shape: bf16[32,32], index: 2, kind: input, shape index: {}]
  %s3 = inlined_call_operand.hbm [shape: bf16[32,64], index: 3, kind: input, shape index: {}]
  %s4 = inlined_call_operand.vmem [shape: bf16[64,32], index: 4, kind: input, shape index: {}]
  %s5 = inlined_call_operand.vmem [shape: f32[8,96], index: 5, kind: input, shape index: {}]
  %s6 = inlined_call_operand.hbm [shape: f32[2,8,32], index: 6, kind: output, shape index: {}]
  %s7 = sld [smem:[#allocation0]]
  $region61: #{tpu_custom_call.1} parent=0
    _
  %s9 = ssub.s32 1, %s7
  %s10 = scalar_select 0, %s9, %s7
  $region1: #{tpu_custom_call.1} parent=0
    #allocation2 [shape = 'u8[8192]{0}', space=vmem, size = 0x2000, scoped, tag = 'input window, operand 3, single buffered']
    #allocation3 [shape = 's32[2]{0}', space=sflag, size = 0x8, scoped, tag = 'scoped memory for tpu_custom_call.1']
    #allocation4 [shape = 's32[2]{0}', space=sflag, size = 0x8, scoped, tag = 'scoped memory for tpu_custom_call.1']
    #allocation5 [shape = 'u8[8192]{0}', space=vmem, size = 0x2000, scoped, tag = 'output window, operand 0']
    %11 = vsyncpa [#allocation3], 0
    %12 = vsyncpa [#allocation4], 0
    %s13 = scalar_lea.sflag [#allocation4], 1
    %14 = vsyncpa %s13, 0
    loop: start=0, step=1, limit=4
    $region2: #{tpu_custom_call.1} parent=1 // loop_pre_header
      _
    $region3: #{tpu_custom_call.1} parent=1 // loop_header
      %s16 = sphi 0, %s20
      %p17 = scmp.ge.s32.totalorder %s16, 4
      %s26 = sphi 0, %s28
      %s29 = sphi 0, %s26
      %s30 = sphi 0, %s29
      %s46 = sphi 0, %s30
      %s50 = sphi 0, %s50
      %s52 = sphi 0, %s50
      %s53 = sphi 0, %s52
      %s67 = sphi 0, %s53
      %s71 = sphi 0, %s71
      %s73 = sphi 0, %s71
      %s74 = sphi 0, %s73
      %s88 = sphi 0, %s74
      %s92 = sphi 0, %s92
      %s94 = sphi 0, %s92
      %s95 = sphi 0, %s94
      %s109 = sphi 0, %s95
      %s113 = sphi 0, %s113
      %s115 = sphi 0, %s113
      %s116 = sphi 0, %s115
      %s130 = sphi 0, %s116
      %s134 = sphi 0, %s134
      %s136 = sphi 0, %s134
      %s137 = sphi 0, %s136
      %s151 = sphi 0, %s137
      %s157 = sphi 0, %s159
      %s160 = sphi 0, %s157
      %s161 = sphi 0, %s160
      %s177 = sphi 0, %s161
    $region4: #{tpu_custom_call.1} parent=1 // loop_header_branch
      %19 = sbr.rel (%p17) target = $region8
    $region5: #{tpu_custom_call.1} parent=1 // loop_body
      %s21 = ssub.s32 %s16, 1
      %s22 = ssub.s32 %s16, 2
      %s23 = sadd.s32 %s16, 1
      %s24 = ssub.s32 %s16, %s23
      %p25 = scmp.eq.s32.totalorder %s24, 0
      %s27 = sadd.s32 %s26, 1
      %s28 = scalar_select %p25, %s26, %s27
      %p31 = pneg %p25
      %p32 = scmp.eq.s32.totalorder %s16, 1
      %p33 = por %p31, %p32
      %p34 = scmp.ne.s32.totalorder %s26, %s29
      %p35 = scmp.eq.s32.totalorder %s16, 0
      %p36 = por %p34, %p35
      %p37 = scmp.ne.s32.totalorder %s26, %s29
      %p38 = scmp.eq.s32.totalorder %s21, 1
      %p39 = por %p37, %p38
      %p40 = scmp.ne.s32.totalorder %s29, %s30
      %p41 = scmp.eq.s32.totalorder %s21, 0
      %p42 = por %p40, %p41
      %p43 = scmp.ne.s32.totalorder %s29, %s30
      %p44 = scmp.eq.s32.totalorder %s22, 1
      %p45 = por %p43, %p44
      %p47 = scmp.ne.s32.totalorder %s30, %s46
      %p48 = scmp.eq.s32.totalorder %s22, 0
      %p49 = por %p47, %p48
      %s51 = sadd.s32 %s50, 1
      %p54 = scmp.eq.s32.totalorder %s16, 1
      %p55 = scmp.ne.s32.totalorder %s50, %s52
      %p56 = scmp.eq.s32.totalorder %s16, 0
      %p57 = por %p55, %p56
      %p58 = scmp.ne.s32.totalorder %s50, %s52
      %p59 = scmp.eq.s32.totalorder %s21, 1
      %p60 = por %p58, %p59
      %p61 = scmp.ne.s32.totalorder %s52, %s53
      %p62 = scmp.eq.s32.totalorder %s21, 0
      %p63 = por %p61, %p62
      %p64 = scmp.ne.s32.totalorder %s52, %s53
      %p65 = scmp.eq.s32.totalorder %s22, 1
      %p66 = por %p64, %p65
      %p68 = scmp.ne.s32.totalorder %s53, %s67
      %p69 = scmp.eq.s32.totalorder %s22, 0
      %p70 = por %p68, %p69
      %s72 = sadd.s32 %s71, 1
      %p75 = scmp.eq.s32.totalorder %s16, 1
      %p76 = scmp.ne.s32.totalorder %s71, %s73
      %p77 = scmp.eq.s32.totalorder %s16, 0
      %p78 = por %p76, %p77
      %p79 = scmp.ne.s32.totalorder %s71, %s73
      %p80 = scmp.eq.s32.totalorder %s21, 1
      %p81 = por %p79, %p80
      %p82 = scmp.ne.s32.totalorder %s73, %s74
      %p83 = scmp.eq.s32.totalorder %s21, 0
      %p84 = por %p82, %p83
      %p85 = scmp.ne.s32.totalorder %s73, %s74
      %p86 = scmp.eq.s32.totalorder %s22, 1
      %p87 = por %p85, %p86
      %p89 = scmp.ne.s32.totalorder %s74, %s88
      %p90 = scmp.eq.s32.totalorder %s22, 0
      %p91 = por %p89, %p90
      %s93 = sadd.s32 %s92, 1
      %p96 = scmp.eq.s32.totalorder %s16, 1
      %p97 = scmp.ne.s32.totalorder %s92, %s94
      %p98 = scmp.eq.s32.totalorder %s16, 0
      %p99 = por %p97, %p98
      %p100 = scmp.ne.s32.totalorder %s92, %s94
      %p101 = scmp.eq.s32.totalorder %s21, 1
      %p102 = por %p100, %p101
      %p103 = scmp.ne.s32.totalorder %s94, %s95
      %p104 = scmp.eq.s32.totalorder %s21, 0
      %p105 = por %p103, %p104
      %p106 = scmp.ne.s32.totalorder %s94, %s95
      %p107 = scmp.eq.s32.totalorder %s22, 1
      %p108 = por %p106, %p107
      %p110 = scmp.ne.s32.totalorder %s95, %s109
      %p111 = scmp.eq.s32.totalorder %s22, 0
      %p112 = por %p110, %p111
      %s114 = sadd.s32 %s113, 1
      %p117 = scmp.eq.s32.totalorder %s16, 1
      %p118 = scmp.ne.s32.totalorder %s113, %s115
      %p119 = scmp.eq.s32.totalorder %s16, 0
      %p120 = por %p118, %p119
      %p121 = scmp.ne.s32.totalorder %s113, %s115
      %p122 = scmp.eq.s32.totalorder %s21, 1
      %p123 = por %p121, %p122
      %p124 = scmp.ne.s32.totalorder %s115, %s116
      %p125 = scmp.eq.s32.totalorder %s21, 0
      %p126 = por %p124, %p125
      %p127 = scmp.ne.s32.totalorder %s115, %s116
      %p128 = scmp.eq.s32.totalorder %s22, 1
      %p129 = por %p127, %p128
      %p131 = scmp.ne.s32.totalorder %s116, %s130
      %p132 = scmp.eq.s32.totalorder %s22, 0
      %p133 = por %p131, %p132
      %s135 = sadd.s32 %s134, 1
      %p138 = scmp.eq.s32.totalorder %s16, 1
      %p139 = scmp.ne.s32.totalorder %s134, %s136
      %p140 = scmp.eq.s32.totalorder %s16, 0
      %p141 = por %p139, %p140
      %p142 = scmp.ne.s32.totalorder %s134, %s136
      %p143 = scmp.eq.s32.totalorder %s21, 1
      %p144 = por %p142, %p143
      %p145 = scmp.ne.s32.totalorder %s136, %s137
      %p146 = scmp.eq.s32.totalorder %s21, 0
      %p147 = por %p145, %p146
      %p148 = scmp.ne.s32.totalorder %s136, %s137
      %p149 = scmp.eq.s32.totalorder %s22, 1
      %p150 = por %p148, %p149
      %p152 = scmp.ne.s32.totalorder %s137, %s151
      %p153 = scmp.eq.s32.totalorder %s22, 0
      %p154 = por %p152, %p153
      %s155 = ssub.s32 %s16, %s23
      %p156 = scmp.eq.s32.totalorder %s155, 0
      %s158 = sadd.s32 %s157, 1
      %s159 = scalar_select %p156, %s157, %s158
      %p162 = pneg %p156
      %p163 = scmp.eq.s32.totalorder %s16, 1
      %p164 = por %p162, %p163
      %p165 = scmp.ne.s32.totalorder %s157, %s160
      %p166 = scmp.eq.s32.totalorder %s16, 0
      %p167 = por %p165, %p166
      %p168 = scmp.ne.s32.totalorder %s157, %s160
      %p169 = scmp.eq.s32.totalorder %s21, 1
      %p170 = por %p168, %p169
      %p171 = scmp.ne.s32.totalorder %s160, %s161
      %p172 = scmp.eq.s32.totalorder %s21, 0
      %p173 = por %p171, %p172
      %p174 = scmp.ne.s32.totalorder %s160, %s161
      %p175 = scmp.eq.s32.totalorder %s22, 1
      %p176 = por %p174, %p175
      %p178 = scmp.ne.s32.totalorder %s161, %s177
      %p179 = scmp.eq.s32.totalorder %s22, 0
      %p180 = por %p178, %p179
      %p181 = scmp.le.s32.totalorder 1, %s16
      %p182 = scmp.lt.s32.totalorder %s16, 3
      %p183 = pnand %p181, %p182
      %p184 = pneg %p183
      // Predicated region
      $region9: #{tpu_custom_call.1} parent=5 // pred_check
        _
      $region10: #{tpu_custom_call.1} parent=5 // pred_check_branch
        %186 = sbr.rel (%p183) target = $region12
      $region11: #{tpu_custom_call.1} parent=5 // pred_region
        %s187 = ssub.s32 %s16, 1
        // Predicated region
        $region13: #{tpu_custom_call.1} parent=11 // pred_check
          %p188 = pneg %p63
        $region14: #{tpu_custom_call.1} parent=11 // pred_check_branch
          %190 = sbr.rel (%p188) target = $region16
        $region15: #{tpu_custom_call.1} parent=11 // pred_region
          _
        $region16: #{tpu_custom_call.1} parent=11 // pred_fallthru
          _
        // Predicated region
        $region17: #{tpu_custom_call.1} parent=11 // pred_check
          %p191 = pneg %p84
        $region18: #{tpu_custom_call.1} parent=11 // pred_check_branch
          %193 = sbr.rel (%p191) target = $region20
        $region19: #{tpu_custom_call.1} parent=11 // pred_region
          _
        $region20: #{tpu_custom_call.1} parent=11 // pred_fallthru
          _
        // Predicated region
        $region21: #{tpu_custom_call.1} parent=11 // pred_check
          %p194 = pneg %p105
        $region22: #{tpu_custom_call.1} parent=11 // pred_check_branch
          %196 = sbr.rel (%p194) target = $region24
        $region23: #{tpu_custom_call.1} parent=11 // pred_region
          %s198 = ssub.s32 256, 256
          %199 = vsyncadd [#allocation3], %s198
          %s200 = sshll.u32 [#allocation2], 4
          %s201 = int_to_ptr.vmem [resolvable:$true] %s200
          %206 = dma.hbm_to_vmem [thread:$0]  %s3, 256, %s201, [#allocation3], 64, 64, 4
        $region24: #{tpu_custom_call.1} parent=11 // pred_fallthru
          _
        // Predicated region
        $region25: #{tpu_custom_call.1} parent=11 // pred_check
          %p207 = pneg %p126
        $region26: #{tpu_custom_call.1} parent=11 // pred_check_branch
          %209 = sbr.rel (%p207) target = $region28
        $region27: #{tpu_custom_call.1} parent=11 // pred_region
          _
        $region28: #{tpu_custom_call.1} parent=11 // pred_fallthru
          _
        // Predicated region
        $region29: #{tpu_custom_call.1} parent=11 // pred_check
          %p210 = pneg %p147
        $region30: #{tpu_custom_call.1} parent=11 // pred_check_branch
          %212 = sbr.rel (%p210) target = $region32
        $region31: #{tpu_custom_call.1} parent=11 // pred_region
          _
        $region32: #{tpu_custom_call.1} parent=11 // pred_fallthru
          _
      $region12: #{tpu_custom_call.1} parent=5 // pred_fallthru
        _
      %p213 = scmp.lt.s32.totalorder %s16, 2
      // Predicated region
      $region33: #{tpu_custom_call.1} parent=5 // pred_check
        %p214 = pneg %p213
      $region34: #{tpu_custom_call.1} parent=5 // pred_check_branch
        %216 = sbr.rel (%p214) target = $region36
      $region35: #{tpu_custom_call.1} parent=5 // pred_region
        // Predicated region
        $region37: #{tpu_custom_call.1} parent=35 // pred_check
          %p217 = pneg %p36
        $region38: #{tpu_custom_call.1} parent=35 // pred_check_branch
          %219 = sbr.rel (%p217) target = $region40
        $region39: #{tpu_custom_call.1} parent=35 // pred_region
          %p220 = scmp.lt.s32.totalorder %s16, 1
          %s221 = scalar_select %p220, %s16, 1
          %s222 = smul.addr %s221, 8
          %s223 = scalar_lea.vmem %s0, %s222
        $region40: #{tpu_custom_call.1} parent=35 // pred_fallthru
          _
      $region36: #{tpu_custom_call.1} parent=5 // pred_fallthru
        _
      %p224 = scmp.le.s32.totalorder 1, %s16
      %p225 = scmp.lt.s32.totalorder %s16, 3
      %p226 = pnand %p224, %p225
      %p227 = pneg %p226
      // Predicated region
      $region41: #{tpu_custom_call.1} parent=5 // pred_check
        _
      $region42: #{tpu_custom_call.1} parent=5 // pred_check_branch
        %229 = sbr.rel (%p226) target = $region44
      $region43: #{tpu_custom_call.1} parent=5 // pred_region
        %s230 = ssub.s32 %s16, 1
        // Predicated region
        $region45: #{tpu_custom_call.1} parent=43 // pred_check
          %p231 = pneg %p105
        $region46: #{tpu_custom_call.1} parent=43 // pred_check_branch
          %233 = sbr.rel (%p231) target = $region48
        $region47: #{tpu_custom_call.1} parent=43 // pred_region
          %234 = dma.done [#allocation3], 256
        $region48: #{tpu_custom_call.1} parent=43 // pred_fallthru
          _
        %p235 = scmp.lt.s32.totalorder %s21, 1
        %s236 = scalar_select %p235, %s21, 1
        %s237 = smul.addr %s236, 8
        %s238 = scalar_lea.vmem %s0, %s237
        %p239 = pneg %p42
        %p240 = pneg %p39
        %p241 = pneg %p63
        %p242 = pneg %p60
        %p243 = pneg %p84
        %p244 = pneg %p81
        %p245 = pneg %p105
        %p246 = pneg %p102
        %p247 = pneg %p126
        %p248 = pneg %p123
        %p249 = pneg %p147
        %p250 = pneg %p144
        %p251 = pneg %p173
        %p252 = pneg %p170
        %s253 = sand.u32 %s160, 1
        %s254 = scalar_lea.sflag [#allocation4], %s253
        %s255 = sand.u32 %s160, 1
        %s256 = smul.addr %s255, 8
        %s257 = scalar_lea.vmem [#allocation5], %s256
        %p258 = scmp.lt.s32.totalorder %s21, 1
        %s259 = scalar_select %p258, %s21, 1
        %s260 = smul.addr %s259, 8
        %s261 = scalar_lea.vmem %s0, %s260
        %v263 = vld [vmem:[%s261] sm:$0xff]
        %v264 = vld [vmem:[%s5] sm:$0xff]
        %v265 = vpack.c.bf16 %v263, %v263
        %v266 = vld [vmem:[%s1] sm:$0xf]
        %v267 = vld [vmem:[%s1 + $0x4] sm:$0xf]
        %v268 = vld [vmem:[%s1 + $0x8] sm:$0xf]
        %v269 = vld [vmem:[%s1 + $0xc] sm:$0xf]
        %v270 = vlaneseq
        %v271 = vshrl.u32 %v270, 7
        %v272 = vsub.s32 0, %v271
        %v273 = vrot.slane %v264, %v272
        %v278 = vunpack.c.l.b16 %v266
        %v279 = vunpack.c.l.b16 %v267
        %v280 = vunpack.c.l.b16 %v268
        %v281 = vunpack.c.l.b16 %v269
        %v282 = vpack.c.b16 %v279, %v278
        %v283 = vpack.c.b16 %v281, %v280
        %vm286 = vcmask 261120
        %v288 = vsel %vm286, %v265, 0
        %290 = vmatprep.subr.bf16.mxu0 0
        %291 = vmatpush1.bf16.msra.mxu0 0
        %292 = vmatprep.subr.bf16.mxu0 0
        %293 = vmatpush1.bf16.msra.mxu0 0
        %294 = vmatprep.subr.bf16.mxu0 0
        %295 = vmatpush1.bf16.msra.mxu0 0
        %296 = vmatprep.subr.bf16.mxu0 0
        %297 = vmatpush1.bf16.msra.mxu0 0
        %298 = vmatprep.subr.bf16.mxu0 0
        %299 = vmatpush1.bf16.msra.mxu0 0
        %300 = vmatprep.subr.bf16.mxu0 0
        %301 = vmatpush1.bf16.msra.mxu0 0
        %302 = vmatprep.subr.bf16.mxu0 0
        %303 = vmatpush1.bf16.msra.mxu0 %v283
        %304 = vmatprep.subr.bf16.mxu0 0
        %305 = vmatpush1.bf16.msra.mxu0 %v282
        %306 = vmatprep.subr.bf16.mxu0 0
        %307 = vmatpush2.bf16.msra.mxu0 0
        %308 = vmatprep.subr.bf16.mxu0 0
        %309 = vmatpush2.bf16.msra.mxu0 0
        %310 = vmatprep.subr.bf16.mxu0 0
        %311 = vmatpush2.bf16.msra.mxu0 0
        %312 = vmatprep.subr.bf16.mxu0 0
        %313 = vmatpush2.bf16.msra.mxu0 0
        %314 = vmatprep.subr.bf16.mxu0 0
        %315 = vmatpush2.bf16.msra.mxu0 0
        %316 = vmatprep.subr.bf16.mxu0 0
        %317 = vmatpush2.bf16.msra.mxu0 0
        %318 = vmatprep.subr.bf16.mxu0 0
        %319 = vmatpush2.bf16.msra.mxu0 0
        %320 = vmatprep.subr.bf16.mxu0 0
        %321 = vmatpush2.bf16.msra.mxu0 0
        %322 = vmatprep.mubr.bf16.mxu0 0
        %323 = vmatmul.mubr.bf16.gmra.mxu0 %v288
        %v324 = vpop.f32.mrf.mxu0
        %v325 = vadd.f32 %v273, %v324
        %v326 = vpop.f32.mrf.mxu0
        %v327 = vpop.f32.mrf.mxu0
        %v328 = vpop.f32.mrf.mxu0
        %329 = vdwg.mxu0
        %v330 = vpack.c.bf16 %v325, %v325
        %332 = vrot.lane.b32.xlu0 %v330, 96
        %v333 = vpop.permute.xlu0 %332
        %vm334 = vcmask 64512
        %v336 = vsel %vm334, %v330, 0
        %v339 = vsel %vm334, %v333, 0
        %341 = vmatprep.subr.bf16.mxu0 0
        %342 = vmatpush1.bf16.xpose.msra.mxu0 0
        %343 = vmatprep.subr.bf16.mxu0 0
        %344 = vmatpush1.bf16.xpose.msra.mxu0 0
        %345 = vmatprep.subr.bf16.mxu0 0
        %346 = vmatpush1.bf16.xpose.msra.mxu0 0
        %347 = vmatprep.subr.bf16.mxu0 0
        %348 = vmatpush1.bf16.xpose.msra.mxu0 0
        %349 = vmatprep.subr.bf16.mxu0 0
        %350 = vmatpush1.bf16.xpose.msra.mxu0 0
        %351 = vmatprep.subr.bf16.mxu0 0
        %352 = vmatpush1.bf16.xpose.msra.mxu0 0
        %353 = vmatprep.subr.bf16.mxu0 0
        %354 = vmatpush1.bf16.xpose.msra.mxu0 0
        %355 = vmatprep.subr.bf16.mxu0 0
        %356 = vmatpush1.bf16.xpose.msra.mxu0 %v339
        %357 = vmatprep.subr.bf16.mxu0 0
        %358 = vmatpush2.bf16.xpose.msra.mxu0 0
        %359 = vmatprep.subr.bf16.mxu0 0
        %360 = vmatpush2.bf16.xpose.msra.mxu0 0
        %361 = vmatprep.subr.bf16.mxu0 0
        %362 = vmatpush2.bf16.xpose.msra.mxu0 0
        %363 = vmatprep.subr.bf16.mxu0 0
        %364 = vmatpush2.bf16.xpose.msra.mxu0 0
        %365 = vmatprep.subr.bf16.mxu0 0
        %366 = vmatpush2.bf16.xpose.msra.mxu0 0
        %367 = vmatprep.subr.bf16.mxu0 0
        %368 = vmatpush2.bf16.xpose.msra.mxu0 0
        %369 = vmatprep.subr.bf16.mxu0 0
        %370 = vmatpush2.bf16.xpose.msra.mxu0 0
        %371 = vmatprep.subr.bf16.mxu0 0
        %372 = vmatpush2.bf16.xpose.msra.mxu0 0
        %373 = vmatprep.mubr.bf16.mxu0 0
        %374 = vmatmul.mubr.bf16.gmra.mxu0 %v336
        %v375 = vpop.f32.mrf.mxu0
        %v376 = vadd.f32 0.0, %v375
        %v377 = vpop.f32.mrf.mxu0
        %v378 = vpop.f32.mrf.mxu0
        %v379 = vpop.f32.mrf.mxu0
        %380 = vdwg.mxu0
        %v381 = vsel %vm334, %v376, -inf
        %382 = vmax.xlane.f32.xlu0 %v381
        %v383 = vpop.xlane.xlu0 %382
        %v384 = vsub.f32 %v376, %v383
        %v385 = vmul.f32 %v384, 1.442695
        %v386 = vpow.pop %v385
        %v387 = vsel %vm334, %v386, 0.0
        %388 = vadd.xlane.f32.xlu0 %v387
        %v389 = vpop.xlane.xlu0 %388
        %v390 = vrcp.pop %v389
        %v391 = vmul.f32 %v386, %v390
        %v392 = vpack.c.bf16 %v391, %v391
        %393 = vrot.lane.b32.xlu0 %v330, 64
        %v394 = vpop.permute.xlu0 %393
        %v396 = vsel %vm334, %v392, 0
        %vm398 = vcmask 1043456
        %v400 = vsel %vm398, %v394, 0
        %402 = vmatprep.subr.bf16.mxu0 0
        %403 = vmatpush1.bf16.msra.mxu0 0
        %404 = vmatprep.subr.bf16.mxu0 0
        %405 = vmatpush1.bf16.msra.mxu0 0
        %406 = vmatprep.subr.bf16.mxu0 0
        %407 = vmatpush1.bf16.msra.mxu0 0
        %408 = vmatprep.subr.bf16.mxu0 0
        %409 = vmatpush1.bf16.msra.mxu0 0
        %410 = vmatprep.subr.bf16.mxu0 0
        %411 = vmatpush1.bf16.msra.mxu0 0
        %412 = vmatprep.subr.bf16.mxu0 0
        %413 = vmatpush1.bf16.msra.mxu0 0
        %414 = vmatprep.subr.bf16.mxu0 0
        %415 = vmatpush1.bf16.msra.mxu0 0
        %416 = vmatprep.subr.bf16.mxu0 0
        %417 = vmatpush1.bf16.msra.mxu0 %v400
        %418 = vmatprep.subr.bf16.mxu0 0
        %419 = vmatpush2.bf16.msra.mxu0 0
        %420 = vmatprep.subr.bf16.mxu0 0
        %421 = vmatpush2.bf16.msra.mxu0 0
        %422 = vmatprep.subr.bf16.mxu0 0
        %423 = vmatpush2.bf16.msra.mxu0 0
        %424 = vmatprep.subr.bf16.mxu0 0
        %425 = vmatpush2.bf16.msra.mxu0 0
        %426 = vmatprep.subr.bf16.mxu0 0
        %427 = vmatpush2.bf16.msra.mxu0 0
        %428 = vmatprep.subr.bf16.mxu0 0
        %429 = vmatpush2.bf16.msra.mxu0 0
        %430 = vmatprep.subr.bf16.mxu0 0
        %431 = vmatpush2.bf16.msra.mxu0 0
        %432 = vmatprep.subr.bf16.mxu0 0
        %433 = vmatpush2.bf16.msra.mxu0 0
        %434 = vmatprep.mubr.bf16.mxu0 0
        %435 = vmatmul.mubr.bf16.gmra.mxu0 %v396
        %v436 = vpop.f32.mrf.mxu0
        %v437 = vadd.f32 0.0, %v436
        %v438 = vpop.f32.mrf.mxu0
        %v439 = vpop.f32.mrf.mxu0
        %v440 = vpop.f32.mrf.mxu0
        %441 = vdwg.mxu0
        %442 = vrot.lane.b32.xlu0 %v330, 120
        %v443 = vpop.permute.xlu0 %442
        %444 = vrot.lane.b32.xlu0 %v330, 88
        %v445 = vpop.permute.xlu0 %444
        %v447 = vsel %vm334, %v443, 0
        %v450 = vsel %vm334, %v445, 0
        %452 = vmatprep.subr.bf16.mxu0 0
        %453 = vmatpush1.bf16.xpose.msra.mxu0 0
        %454 = vmatprep.subr.bf16.mxu0 0
        %455 = vmatpush1.bf16.xpose.msra.mxu0 0
        %456 = vmatprep.subr.bf16.mxu0 0
        %457 = vmatpush1.bf16.xpose.msra.mxu0 0
        %458 = vmatprep.subr.bf16.mxu0 0
        %459 = vmatpush1.bf16.xpose.msra.mxu0 0
        %460 = vmatprep.subr.bf16.mxu0 0
        %461 = vmatpush1.bf16.xpose.msra.mxu0 0
        %462 = vmatprep.subr.bf16.mxu0 0
        %463 = vmatpush1.bf16.xpose.msra.mxu0 0
        %464 = vmatprep.subr.bf16.mxu0 0
        %465 = vmatpush1.bf16.xpose.msra.mxu0 0
        %466 = vmatprep.subr.bf16.mxu0 0
        %467 = vmatpush1.bf16.xpose.msra.mxu0 %v450
        %468 = vmatprep.subr.bf16.mxu0 0
        %469 = vmatpush2.bf16.xpose.msra.mxu0 0
        %470 = vmatprep.subr.bf16.mxu0 0
        %471 = vmatpush2.bf16.xpose.msra.mxu0 0
        %472 = vmatprep.subr.bf16.mxu0 0
        %473 = vmatpush2.bf16.xpose.msra.mxu0 0
        %474 = vmatprep.subr.bf16.mxu0 0
        %475 = vmatpush2.bf16.xpose.msra.mxu0 0
        %476 = vmatprep.subr.bf16.mxu0 0
        %477 = vmatpush2.bf16.xpose.msra.mxu0 0
        %478 = vmatprep.subr.bf16.mxu0 0
        %479 = vmatpush2.bf16.xpose.msra.mxu0 0
        %480 = vmatprep.subr.bf16.mxu0 0
        %481 = vmatpush2.bf16.xpose.msra.mxu0 0
        %482 = vmatprep.subr.bf16.mxu0 0
        %483 = vmatpush2.bf16.xpose.msra.mxu0 0
        %484 = vmatprep.mubr.bf16.mxu0 0
        %485 = vmatmul.mubr.bf16.gmra.mxu0 %v447
        %v486 = vpop.f32.mrf.mxu0
        %v487 = vadd.f32 0.0, %v486
        %v488 = vpop.f32.mrf.mxu0
        %v489 = vpop.f32.mrf.mxu0
        %v490 = vpop.f32.mrf.mxu0
        %491 = vdwg.mxu0
        %v492 = vsel %vm334, %v487, -inf
        %493 = vmax.xlane.f32.xlu0 %v492
        %v494 = vpop.xlane.xlu0 %493
        %v495 = vsub.f32 %v487, %v494
        %v496 = vmul.f32 %v495, 1.442695
        %v497 = vpow.pop %v496
        %v498 = vsel %vm334, %v497, 0.0
        %499 = vadd.xlane.f32.xlu0 %v498
        %v500 = vpop.xlane.xlu0 %499
        %v501 = vrcp.pop %v500
        %v502 = vmul.f32 %v497, %v501
        %v503 = vpack.c.bf16 %v502, %v502
        %504 = vrot.lane.b32.xlu0 %v330, 56
        %v505 = vpop.permute.xlu0 %504
        %v507 = vsel %vm334, %v503, 0
        %v510 = vsel %vm398, %v505, 0
        %512 = vmatprep.subr.bf16.mxu0 0
        %513 = vmatpush1.bf16.msra.mxu0 0
        %514 = vmatprep.subr.bf16.mxu0 0
        %515 = vmatpush1.bf16.msra.mxu0 0
        %516 = vmatprep.subr.bf16.mxu0 0
        %517 = vmatpush1.bf16.msra.mxu0 0
        %518 = vmatprep.subr.bf16.mxu0 0
        %519 = vmatpush1.bf16.msra.mxu0 0
        %520 = vmatprep.subr.bf16.mxu0 0
        %521 = vmatpush1.bf16.msra.mxu0 0
        %522 = vmatprep.subr.bf16.mxu0 0
        %523 = vmatpush1.bf16.msra.mxu0 0
        %524 = vmatprep.subr.bf16.mxu0 0
        %525 = vmatpush1.bf16.msra.mxu0 0
        %526 = vmatprep.subr.bf16.mxu0 0
        %527 = vmatpush1.bf16.msra.mxu0 %v510
        %528 = vmatprep.subr.bf16.mxu0 0
        %529 = vmatpush2.bf16.msra.mxu0 0
        %530 = vmatprep.subr.bf16.mxu0 0
        %531 = vmatpush2.bf16.msra.mxu0 0
        %532 = vmatprep.subr.bf16.mxu0 0
        %533 = vmatpush2.bf16.msra.mxu0 0
        %534 = vmatprep.subr.bf16.mxu0 0
        %535 = vmatpush2.bf16.msra.mxu0 0
        %536 = vmatprep.subr.bf16.mxu0 0
        %537 = vmatpush2.bf16.msra.mxu0 0
        %538 = vmatprep.subr.bf16.mxu0 0
        %539 = vmatpush2.bf16.msra.mxu0 0
        %540 = vmatprep.subr.bf16.mxu0 0
        %541 = vmatpush2.bf16.msra.mxu0 0
        %542 = vmatprep.subr.bf16.mxu0 0
        %543 = vmatpush2.bf16.msra.mxu0 0
        %544 = vmatprep.mubr.bf16.mxu0 0
        %545 = vmatmul.mubr.bf16.gmra.mxu0 %v507
        %v546 = vpop.f32.mrf.mxu0
        %v547 = vadd.f32 0.0, %v546
        %v548 = vpop.f32.mrf.mxu0
        %v549 = vpop.f32.mrf.mxu0
        %v550 = vpop.f32.mrf.mxu0
        %551 = vdwg.mxu0
        %552 = vrot.lane.b32.xlu0 %v330, 112
        %v553 = vpop.permute.xlu0 %552
        %554 = vrot.lane.b32.xlu0 %v330, 80
        %v555 = vpop.permute.xlu0 %554
        %v557 = vsel %vm334, %v553, 0
        %v560 = vsel %vm334, %v555, 0
        %562 = vmatprep.subr.bf16.mxu0 0
        %563 = vmatpush1.bf16.xpose.msra.mxu0 0
        %564 = vmatprep.subr.bf16.mxu0 0
        %565 = vmatpush1.bf16.xpose.msra.mxu0 0
        %566 = vmatprep.subr.bf16.mxu0 0
        %567 = vmatpush1.bf16.xpose.msra.mxu0 0
        %568 = vmatprep.subr.bf16.mxu0 0
        %569 = vmatpush1.bf16.xpose.msra.mxu0 0
        %570 = vmatprep.subr.bf16.mxu0 0
        %571 = vmatpush1.bf16.xpose.msra.mxu0 0
        %572 = vmatprep.subr.bf16.mxu0 0
        %573 = vmatpush1.bf16.xpose.msra.mxu0 0
        %574 = vmatprep.subr.bf16.mxu0 0
        %575 = vmatpush1.bf16.xpose.msra.mxu0 0
        %576 = vmatprep.subr.bf16.mxu0 0
        %577 = vmatpush1.bf16.xpose.msra.mxu0 %v560
        %578 = vmatprep.subr.bf16.mxu0 0
        %579 = vmatpush2.bf16.xpose.msra.mxu0 0
        %580 = vmatprep.subr.bf16.mxu0 0
        %581 = vmatpush2.bf16.xpose.msra.mxu0 0
        %582 = vmatprep.subr.bf16.mxu0 0
        %583 = vmatpush2.bf16.xpose.msra.mxu0 0
        %584 = vmatprep.subr.bf16.mxu0 0
        %585 = vmatpush2.bf16.xpose.msra.mxu0 0
        %586 = vmatprep.subr.bf16.mxu0 0
        %587 = vmatpush2.bf16.xpose.msra.mxu0 0
        %588 = vmatprep.subr.bf16.mxu0 0
        %589 = vmatpush2.bf16.xpose.msra.mxu0 0
        %590 = vmatprep.subr.bf16.mxu0 0
        %591 = vmatpush2.bf16.xpose.msra.mxu0 0
        %592 = vmatprep.subr.bf16.mxu0 0
        %593 = vmatpush2.bf16.xpose.msra.mxu0 0
        %594 = vmatprep.mubr.bf16.mxu0 0
        %595 = vmatmul.mubr.bf16.gmra.mxu0 %v557
        %v596 = vpop.f32.mrf.mxu0
        %v597 = vadd.f32 0.0, %v596
        %v598 = vpop.f32.mrf.mxu0
        %v599 = vpop.f32.mrf.mxu0
        %v600 = vpop.f32.mrf.mxu0
        %601 = vdwg.mxu0
        %v602 = vsel %vm334, %v597, -inf
        %603 = vmax.xlane.f32.xlu0 %v602
        %v604 = vpop.xlane.xlu0 %603
        %v605 = vsub.f32 %v597, %v604
        %v606 = vmul.f32 %v605, 1.442695
        %v607 = vpow.pop %v606
        %v608 = vsel %vm334, %v607, 0.0
        %609 = vadd.xlane.f32.xlu0 %v608
        %v610 = vpop.xlane.xlu0 %609
        %v611 = vrcp.pop %v610
        %v612 = vmul.f32 %v607, %v611
        %v613 = vpack.c.bf16 %v612, %v612
        %614 = vrot.lane.b32.xlu0 %v330, 48
        %v615 = vpop.permute.xlu0 %614
        %v617 = vsel %vm334, %v613, 0
        %v620 = vsel %vm398, %v615, 0
        %622 = vmatprep.subr.bf16.mxu0 0
        %623 = vmatpush1.bf16.msra.mxu0 0
        %624 = vmatprep.subr.bf16.mxu0 0
        %625 = vmatpush1.bf16.msra.mxu0 0
        %626 = vmatprep.subr.bf16.mxu0 0
        %627 = vmatpush1.bf16.msra.mxu0 0
        %628 = vmatprep.subr.bf16.mxu0 0
        %629 = vmatpush1.bf16.msra.mxu0 0
        %630 = vmatprep.subr.bf16.mxu0 0
        %631 = vmatpush1.bf16.msra.mxu0 0
        %632 = vmatprep.subr.bf16.mxu0 0
        %633 = vmatpush1.bf16.msra.mxu0 0
        %634 = vmatprep.subr.bf16.mxu0 0
        %635 = vmatpush1.bf16.msra.mxu0 0
        %636 = vmatprep.subr.bf16.mxu0 0
        %637 = vmatpush1.bf16.msra.mxu0 %v620
        %638 = vmatprep.subr.bf16.mxu0 0
        %639 = vmatpush2.bf16.msra.mxu0 0
        %640 = vmatprep.subr.bf16.mxu0 0
        %641 = vmatpush2.bf16.msra.mxu0 0
        %642 = vmatprep.subr.bf16.mxu0 0
        %643 = vmatpush2.bf16.msra.mxu0 0
        %644 = vmatprep.subr.bf16.mxu0 0
        %645 = vmatpush2.bf16.msra.mxu0 0
        %646 = vmatprep.subr.bf16.mxu0 0
        %647 = vmatpush2.bf16.msra.mxu0 0
        %648 = vmatprep.subr.bf16.mxu0 0
        %649 = vmatpush2.bf16.msra.mxu0 0
        %650 = vmatprep.subr.bf16.mxu0 0
        %651 = vmatpush2.bf16.msra.mxu0 0
        %652 = vmatprep.subr.bf16.mxu0 0
        %653 = vmatpush2.bf16.msra.mxu0 0
        %654 = vmatprep.mubr.bf16.mxu0 0
        %655 = vmatmul.mubr.bf16.gmra.mxu0 %v617
        %v656 = vpop.f32.mrf.mxu0
        %v657 = vadd.f32 0.0, %v656
        %v658 = vpop.f32.mrf.mxu0
        %v659 = vpop.f32.mrf.mxu0
        %v660 = vpop.f32.mrf.mxu0
        %661 = vdwg.mxu0
        %662 = vrot.lane.b32.xlu0 %v330, 104
        %v663 = vpop.permute.xlu0 %662
        %664 = vrot.lane.b32.xlu0 %v330, 72
        %v665 = vpop.permute.xlu0 %664
        %v667 = vsel %vm334, %v663, 0
        %v670 = vsel %vm334, %v665, 0
        %672 = vmatprep.subr.bf16.mxu0 0
        %673 = vmatpush1.bf16.xpose.msra.mxu0 0
        %674 = vmatprep.subr.bf16.mxu0 0
        %675 = vmatpush1.bf16.xpose.msra.mxu0 0
        %676 = vmatprep.subr.bf16.mxu0 0
        %677 = vmatpush1.bf16.xpose.msra.mxu0 0
        %678 = vmatprep.subr.bf16.mxu0 0
        %679 = vmatpush1.bf16.xpose.msra.mxu0 0
        %680 = vmatprep.subr.bf16.mxu0 0
        %681 = vmatpush1.bf16.xpose.msra.mxu0 0
        %682 = vmatprep.subr.bf16.mxu0 0
        %683 = vmatpush1.bf16.xpose.msra.mxu0 0
        %684 = vmatprep.subr.bf16.mxu0 0
        %685 = vmatpush1.bf16.xpose.msra.mxu0 0
        %686 = vmatprep.subr.bf16.mxu0 0
        %687 = vmatpush1.bf16.xpose.msra.mxu0 %v670
        %688 = vmatprep.subr.bf16.mxu0 0
        %689 = vmatpush2.bf16.xpose.msra.mxu0 0
        %690 = vmatprep.subr.bf16.mxu0 0
        %691 = vmatpush2.bf16.xpose.msra.mxu0 0
        %692 = vmatprep.subr.bf16.mxu0 0
        %693 = vmatpush2.bf16.xpose.msra.mxu0 0
        %694 = vmatprep.subr.bf16.mxu0 0
        %695 = vmatpush2.bf16.xpose.msra.mxu0 0
        %696 = vmatprep.subr.bf16.mxu0 0
        %697 = vmatpush2.bf16.xpose.msra.mxu0 0
        %698 = vmatprep.subr.bf16.mxu0 0
        %699 = vmatpush2.bf16.xpose.msra.mxu0 0
        %700 = vmatprep.subr.bf16.mxu0 0
        %701 = vmatpush2.bf16.xpose.msra.mxu0 0
        %702 = vmatprep.subr.bf16.mxu0 0
        %703 = vmatpush2.bf16.xpose.msra.mxu0 0
        %704 = vmatprep.mubr.bf16.mxu0 0
        %705 = vmatmul.mubr.bf16.gmra.mxu0 %v667
        %v706 = vpop.f32.mrf.mxu0
        %v707 = vadd.f32 0.0, %v706
        %v708 = vpop.f32.mrf.mxu0
        %v709 = vpop.f32.mrf.mxu0
        %v710 = vpop.f32.mrf.mxu0
        %711 = vdwg.mxu0
        %v712 = vsel %vm334, %v707, -inf
        %713 = vmax.xlane.f32.xlu0 %v712
        %v714 = vpop.xlane.xlu0 %713
        %v715 = vsub.f32 %v707, %v714
        %v716 = vmul.f32 %v715, 1.442695
        %v717 = vpow.pop %v716
        %v718 = vsel %vm334, %v717, 0.0
        %719 = vadd.xlane.f32.xlu0 %v718
        %v720 = vpop.xlane.xlu0 %719
        %v721 = vrcp.pop %v720
        %v722 = vmul.f32 %v717, %v721
        %v723 = vpack.c.bf16 %v722, %v722
        %724 = vrot.lane.b32.xlu0 %v330, 40
        %v725 = vpop.permute.xlu0 %724
        %v727 = vsel %vm334, %v723, 0
        %v730 = vsel %vm398, %v725, 0
        %732 = vmatprep.subr.bf16.mxu0 0
        %733 = vmatpush1.bf16.msra.mxu0 0
        %734 = vmatprep.subr.bf16.mxu0 0
        %735 = vmatpush1.bf16.msra.mxu0 0
        %736 = vmatprep.subr.bf16.mxu0 0
        %737 = vmatpush1.bf16.msra.mxu0 0
        %738 = vmatprep.subr.bf16.mxu0 0
        %739 = vmatpush1.bf16.msra.mxu0 0
        %740 = vmatprep.subr.bf16.mxu0 0
        %741 = vmatpush1.bf16.msra.mxu0 0
        %742 = vmatprep.subr.bf16.mxu0 0
        %743 = vmatpush1.bf16.msra.mxu0 0
        %744 = vmatprep.subr.bf16.mxu0 0
        %745 = vmatpush1.bf16.msra.mxu0 0
        %746 = vmatprep.subr.bf16.mxu0 0
        %747 = vmatpush1.bf16.msra.mxu0 %v730
        %748 = vmatprep.subr.bf16.mxu0 0
        %749 = vmatpush2.bf16.msra.mxu0 0
        %750 = vmatprep.subr.bf16.mxu0 0
        %751 = vmatpush2.bf16.msra.mxu0 0
        %752 = vmatprep.subr.bf16.mxu0 0
        %753 = vmatpush2.bf16.msra.mxu0 0
        %754 = vmatprep.subr.bf16.mxu0 0
        %755 = vmatpush2.bf16.msra.mxu0 0
        %756 = vmatprep.subr.bf16.mxu0 0
        %757 = vmatpush2.bf16.msra.mxu0 0
        %758 = vmatprep.subr.bf16.mxu0 0
        %759 = vmatpush2.bf16.msra.mxu0 0
        %760 = vmatprep.subr.bf16.mxu0 0
        %761 = vmatpush2.bf16.msra.mxu0 0
        %762 = vmatprep.subr.bf16.mxu0 0
        %763 = vmatpush2.bf16.msra.mxu0 0
        %764 = vmatprep.mubr.bf16.mxu0 0
        %765 = vmatmul.mubr.bf16.gmra.mxu0 %v727
        %v766 = vpop.f32.mrf.mxu0
        %v767 = vadd.f32 0.0, %v766
        %v768 = vpop.f32.mrf.mxu0
        %v769 = vpop.f32.mrf.mxu0
        %v770 = vpop.f32.mrf.mxu0
        %771 = vdwg.mxu0
        %773 = vrot.lane.b32.xlu0 %v547, 8
        %v774 = vpop.permute.xlu0 %773
        %777 = vrot.lane.b32.xlu0 %v657, 16
        %v778 = vpop.permute.xlu0 %777
        %781 = vrot.lane.b32.xlu0 %v767, 24
        %v782 = vpop.permute.xlu0 %781
        %v784 = vsel %vm334, %v437, %v774
        %vm785 = vcmask 130048
        %v786 = vsel %vm785, %v784, %v778
        %vm787 = vcmask 195584
        %v788 = vsel %vm787, %v786, %v782
        %v789 = vpack.c.bf16 %v788, %v788
        %v790 = vld [vmem:[%s2] sm:$0xf]
        %v791 = vld [vmem:[%s2 + $0x4] sm:$0xf]
        %v792 = vld [vmem:[%s2 + $0x8] sm:$0xf]
        %v793 = vld [vmem:[%s2 + $0xc] sm:$0xf]
        %v794 = vlaneseq
        %v795 = vshrl.u32 %v794, 7
        %v796 = vsub.s32 2, %v795
        %v797 = vrot.slane %v264, %v796
        %v802 = vunpack.c.l.b16 %v790
        %v803 = vunpack.c.l.b16 %v791
        %v804 = vunpack.c.l.b16 %v792
        %v805 = vunpack.c.l.b16 %v793
        %v806 = vpack.c.b16 %v803, %v802
        %v807 = vpack.c.b16 %v805, %v804
        %v811 = vsel %vm286, %v789, 0
        %813 = vmatprep.subr.bf16.mxu0 0
        %814 = vmatpush1.bf16.msra.mxu0 0
        %815 = vmatprep.subr.bf16.mxu0 0
        %816 = vmatpush1.bf16.msra.mxu0 0
        %817 = vmatprep.subr.bf16.mxu0 0
        %818 = vmatpush1.bf16.msra.mxu0 0
        %819 = vmatprep.subr.bf16.mxu0 0
        %820 = vmatpush1.bf16.msra.mxu0 0
        %821 = vmatprep.subr.bf16.mxu0 0
        %822 = vmatpush1.bf16.msra.mxu0 0
        %823 = vmatprep.subr.bf16.mxu0 0
        %824 = vmatpush1.bf16.msra.mxu0 0
        %825 = vmatprep.subr.bf16.mxu0 0
        %826 = vmatpush1.bf16.msra.mxu0 %v807
        %827 = vmatprep.subr.bf16.mxu0 0
        %828 = vmatpush1.bf16.msra.mxu0 %v806
        %829 = vmatprep.subr.bf16.mxu0 0
        %830 = vmatpush2.bf16.msra.mxu0 0
        %831 = vmatprep.subr.bf16.mxu0 0
        %832 = vmatpush2.bf16.msra.mxu0 0
        %833 = vmatprep.subr.bf16.mxu0 0
        %834 = vmatpush2.bf16.msra.mxu0 0
        %835 = vmatprep.subr.bf16.mxu0 0
        %836 = vmatpush2.bf16.msra.mxu0 0
        %837 = vmatprep.subr.bf16.mxu0 0
        %838 = vmatpush2.bf16.msra.mxu0 0
        %839 = vmatprep.subr.bf16.mxu0 0
        %840 = vmatpush2.bf16.msra.mxu0 0
        %841 = vmatprep.subr.bf16.mxu0 0
        %842 = vmatpush2.bf16.msra.mxu0 0
        %843 = vmatprep.subr.bf16.mxu0 0
        %844 = vmatpush2.bf16.msra.mxu0 0
        %845 = vmatprep.mubr.bf16.mxu0 0
        %846 = vmatmul.mubr.bf16.gmra.mxu0 %v811
        %v847 = vpop.f32.mrf.mxu0
        %v848 = vadd.f32 %v797, %v847
        %v849 = vpop.f32.mrf.mxu0
        %v850 = vpop.f32.mrf.mxu0
        %v851 = vpop.f32.mrf.mxu0
        %852 = vdwg.mxu0
        %v853 = vadd.f32 %v263, %v848
        %v854 = vsel %vm286, %v853, 0.0
        %855 = vadd.xlane.f32.xlu0 %v854
        %v856 = vpop.xlane.xlu0 %855
        %v857 = vrcp.pop 32.0
        %v858 = vmul.f32 %v856, %v857
        %v859 = vsub.f32 %v853, %v858
        %v860 = vmul.f32 %v859, %v859
        %v861 = vsel %vm286, %v860, 0.0
        %862 = vadd.xlane.f32.xlu0 %v861
        %v863 = vpop.xlane.xlu0 %862
        %v864 = vmul.f32 %v863, %v857
        %v865 = vadd.f32 %v864, 1e-05
        %v866 = vrsqrt.pop %v865
        %v867 = vmul.f32 %v859, %v866
        %v868 = vlaneseq
        %v869 = vshrl.u32 %v868, 7
        %v870 = vsub.s32 3, %v869
        %v871 = vrot.slane %v264, %v870
        %v872 = vmul.f32 %v867, %v871
        %v873 = vlaneseq
        %v874 = vshrl.u32 %v873, 7
        %v875 = vsub.s32 4, %v874
        %v876 = vrot.slane %v264, %v875
        %v877 = vadd.f32 %v872, %v876
        %v878 = vpack.c.bf16 %v877, %v877
        %v879 = vld [vmem:[#allocation2] sm:$0xf]
        %v880 = vld [vmem:[#allocation2 + $0x4] sm:$0xf]
        %v881 = vld [vmem:[#allocation2 + $0x8] sm:$0xf]
        %v882 = vld [vmem:[#allocation2 + $0xc] sm:$0xf]
        %v883 = vlaneseq
        %v884 = vshrl.u32 %v883, 7
        %v885 = vsub.s32 1, %v884
        %v886 = vrot.slane %v264, %v885
        %v891 = vunpack.c.l.b16 %v879
        %v892 = vunpack.c.l.b16 %v880
        %v893 = vunpack.c.l.b16 %v881
        %v894 = vunpack.c.l.b16 %v882
        %v895 = vpack.c.b16 %v892, %v891
        %v896 = vpack.c.b16 %v894, %v893
        %v900 = vsel %vm286, %v878, 0
        %902 = vmatprep.subr.bf16.mxu0 0
        %903 = vmatpush1.bf16.msra.mxu0 0
        %904 = vmatprep.subr.bf16.mxu0 0
        %905 = vmatpush1.bf16.msra.mxu0 0
        %906 = vmatprep.subr.bf16.mxu0 0
        %907 = vmatpush1.bf16.msra.mxu0 0
        %908 = vmatprep.subr.bf16.mxu0 0
        %909 = vmatpush1.bf16.msra.mxu0 0
        %910 = vmatprep.subr.bf16.mxu0 0
        %911 = vmatpush1.bf16.msra.mxu0 0
        %912 = vmatprep.subr.bf16.mxu0 0
        %913 = vmatpush1.bf16.msra.mxu0 0
        %914 = vmatprep.subr.bf16.mxu0 0
        %915 = vmatpush1.bf16.msra.mxu0 %v896
        %916 = vmatprep.subr.bf16.mxu0 0
        %917 = vmatpush1.bf16.msra.mxu0 %v895
        %918 = vmatprep.subr.bf16.mxu0 0
        %919 = vmatpush2.bf16.msra.mxu0 0
        %920 = vmatprep.subr.bf16.mxu0 0
        %921 = vmatpush2.bf16.msra.mxu0 0
        %922 = vmatprep.subr.bf16.mxu0 0
        %923 = vmatpush2.bf16.msra.mxu0 0
        %924 = vmatprep.subr.bf16.mxu0 0
        %925 = vmatpush2.bf16.msra.mxu0 0
        %926 = vmatprep.subr.bf16.mxu0 0
        %927 = vmatpush2.bf16.msra.mxu0 0
        %928 = vmatprep.subr.bf16.mxu0 0
        %929 = vmatpush2.bf16.msra.mxu0 0
        %930 = vmatprep.subr.bf16.mxu0 0
        %931 = vmatpush2.bf16.msra.mxu0 0
        %932 = vmatprep.subr.bf16.mxu0 0
        %933 = vmatpush2.bf16.msra.mxu0 0
        %934 = vmatprep.mubr.bf16.mxu0 0
        %935 = vmatmul.mubr.bf16.gmra.mxu0 %v900
        %v936 = vpop.f32.mrf.mxu0
        %v937 = vadd.f32 %v886, %v936
        %v938 = vpop.f32.mrf.mxu0
        %v939 = vpop.f32.mrf.mxu0
        %v940 = vpop.f32.mrf.mxu0
        %941 = vdwg.mxu0
        %v942 = vmul.f32 %v937, 0.5
        %v943 = vmul.f32 %v937, 0.70710677
        %v944 = vand.u32 2147483647, %v943
        %v945 = vmul.f32 %v944, 0.3275911
        %v946 = vadd.f32 %v945, 1.0
        %v947 = vrcp.pop %v946
        %v948 = vmul.f32 1.0, %v947
        %v949 = vmul.f32 %v948, 1.0614054
        %v950 = vadd.f32 %v949, -1.4531521
        %v951 = vmul.f32 %v950, %v948
        %v952 = vadd.f32 %v951, 1.4214138
        %v953 = vmul.f32 %v952, %v948
        %v954 = vadd.f32 %v953, -0.28449672
        %v955 = vmul.f32 %v954, %v948
        %v956 = vadd.f32 %v955, 0.2548296
        %v957 = vmul.f32 %v956, %v948
        %v958 = vsub.f32 0.0, %v944
        %v959 = vmul.f32 %v958, %v944
        %v960 = vmul.f32 %v959, 1.442695
        %v961 = vpow.pop %v960
        %v962 = vmul.f32 %v957, %v961
        %v963 = vsub.f32 1.0, %v962
        %vm964 = vcmp.lt.f32.partialorder %v943, 0.0
        %v965 = vsub.f32 0.0, %v963
        %v966 = vsel %vm964, %v965, %v963
        %v967 = vadd.f32 %v966, 1.0
        %v968 = vmul.f32 %v942, %v967
        %v969 = vpack.c.bf16 %v968, %v968
        %v970 = vld [vmem:[%s4] sm:$0xf]
        %v971 = vld [vmem:[%s4 + $0x4] sm:$0xf]
        %v972 = vld [vmem:[%s4 + $0x8] sm:$0xf]
        %v973 = vld [vmem:[%s4 + $0xc] sm:$0xf]
        %v974 = vld [vmem:[%s4 + $0x10] sm:$0xf]
        %v975 = vld [vmem:[%s4 + $0x14] sm:$0xf]
        %v976 = vld [vmem:[%s4 + $0x18] sm:$0xf]
        %v977 = vld [vmem:[%s4 + $0x1c] sm:$0xf]
        %v978 = vlaneseq
        %v979 = vshrl.u32 %v978, 7
        %v980 = vsub.s32 7, %v979
        %v981 = vrot.slane %v264, %v980
        %v990 = vunpack.c.l.b16 %v970
        %v991 = vunpack.c.l.b16 %v971
        %v992 = vunpack.c.l.b16 %v972
        %v993 = vunpack.c.l.b16 %v973
        %v994 = vunpack.c.l.b16 %v974
        %v995 = vunpack.c.l.b16 %v975
        %v996 = vunpack.c.l.b16 %v976
        %v997 = vunpack.c.l.b16 %v977
        %v998 = vpack.c.b16 %v991, %v990
        %v999 = vpack.c.b16 %v993, %v992
        %v1000 = vpack.c.b16 %v995, %v994
        %v1001 = vpack.c.b16 %v997, %v996
        %vm1006 = vcmask 523264
        %v1008 = vsel %vm1006, %v969, 0
        %1010 = vmatprep.subr.bf16.mxu0 0
        %1011 = vmatpush1.bf16.msra.mxu0 0
        %1012 = vmatprep.subr.bf16.mxu0 0
        %1013 = vmatpush1.bf16.msra.mxu0 0
        %1014 = vmatprep.subr.bf16.mxu0 0
        %1015 = vmatpush1.bf16.msra.mxu0 0
        %1016 = vmatprep.subr.bf16.mxu0 0
        %1017 = vmatpush1.bf16.msra.mxu0 0
        %1018 = vmatprep.subr.bf16.mxu0 0
        %1019 = vmatpush1.bf16.msra.mxu0 %v1001
        %1020 = vmatprep.subr.bf16.mxu0 0
        %1021 = vmatpush1.bf16.msra.mxu0 %v1000
        %1022 = vmatprep.subr.bf16.mxu0 0
        %1023 = vmatpush1.bf16.msra.mxu0 %v999
        %1024 = vmatprep.subr.bf16.mxu0 0
        %1025 = vmatpush1.bf16.msra.mxu0 %v998
        %1026 = vmatprep.subr.bf16.mxu0 0
        %1027 = vmatpush2.bf16.msra.mxu0 0
        %1028 = vmatprep.subr.bf16.mxu0 0
        %1029 = vmatpush2.bf16.msra.mxu0 0
        %1030 = vmatprep.subr.bf16.mxu0 0
        %1031 = vmatpush2.bf16.msra.mxu0 0
        %1032 = vmatprep.subr.bf16.mxu0 0
        %1033 = vmatpush2.bf16.msra.mxu0 0
        %1034 = vmatprep.subr.bf16.mxu0 0
        %1035 = vmatpush2.bf16.msra.mxu0 0
        %1036 = vmatprep.subr.bf16.mxu0 0
        %1037 = vmatpush2.bf16.msra.mxu0 0
        %1038 = vmatprep.subr.bf16.mxu0 0
        %1039 = vmatpush2.bf16.msra.mxu0 0
        %1040 = vmatprep.subr.bf16.mxu0 0
        %1041 = vmatpush2.bf16.msra.mxu0 0
        %1042 = vmatprep.mubr.bf16.mxu0 0
        %1043 = vmatmul.mubr.bf16.gmra.mxu0 %v1008
        %v1044 = vpop.f32.mrf.mxu0
        %v1045 = vadd.f32 %v981, %v1044
        %v1046 = vpop.f32.mrf.mxu0
        %v1047 = vpop.f32.mrf.mxu0
        %v1048 = vpop.f32.mrf.mxu0
        %1049 = vdwg.mxu0
        %v1050 = vadd.f32 %v877, %v1045
        %v1051 = vsel %vm286, %v1050, 0.0
        %1052 = vadd.xlane.f32.xlu0 %v1051
        %v1053 = vpop.xlane.xlu0 %1052
        %v1054 = vmul.f32 %v1053, %v857
        %v1055 = vsub.f32 %v1050, %v1054
        %v1056 = vmul.f32 %v1055, %v1055
        %v1057 = vsel %vm286, %v1056, 0.0
        %1058 = vadd.xlane.f32.xlu0 %v1057
        %v1059 = vpop.xlane.xlu0 %1058
        %v1060 = vmul.f32 %v1059, %v857
        %v1061 = vadd.f32 %v1060, 1e-05
        %v1062 = vrsqrt.pop %v1061
        %v1063 = vmul.f32 %v1055, %v1062
        %v1064 = vlaneseq
        %v1065 = vshrl.u32 %v1064, 7
        %v1066 = vsub.s32 5, %v1065
        %v1067 = vrot.slane %v264, %v1066
        %v1068 = vmul.f32 %v1063, %v1067
        %v1069 = vlaneseq
        %v1070 = vshrl.u32 %v1069, 7
        %v1071 = vsub.s32 6, %v1070
        %v1072 = vrot.slane %v264, %v1071
        %v1073 = vadd.f32 %v1068, %v1072
        %1074 = vst.msk [vmem:[%s257] sm:$0xff] %vm286, %v1073
        %s1075 = sand.u32 %s160, 1
        %s1076 = scalar_lea.sflag [#allocation4], %s1075
        %s1077 = sand.u32 %s160, 1
        %s1078 = smul.addr %s1077, 8
        %s1079 = scalar_lea.vmem [#allocation5], %s1078
        // Predicated region
        $region49: #{tpu_custom_call.1} parent=43 // pred_check
          %p1080 = pneg %p170
        $region50: #{tpu_custom_call.1} parent=43 // pred_check_branch
          %1082 = sbr.rel (%p1080) target = $region52
        $region51: #{tpu_custom_call.1} parent=43 // pred_region
          %s1084 = ssub.s32 128, 128
          %1085 = vsyncadd %s1076, %s1084
          %s1086 = smul.addr %s21, 128
          %s1087 = scalar_lea.hbm %s6, %s1086
          %s1089 = sshll.u32 %s1079, 4
          %s1090 = int_to_ptr.vmem [resolvable:$true] %s1089
          %1092 = dma.vmem_to_hbm [thread:$0]  %s1090, 128, %s1087, %s1076
        $region52: #{tpu_custom_call.1} parent=43 // pred_fallthru
          _
      $region44: #{tpu_custom_call.1} parent=5 // pred_fallthru
        _
      %p1093 = scmp.le.s32.totalorder 2, %s16
      // Predicated region
      $region53: #{tpu_custom_call.1} parent=5 // pred_check
        %p1094 = pneg %p1093
      $region54: #{tpu_custom_call.1} parent=5 // pred_check_branch
        %1096 = sbr.rel (%p1094) target = $region56
      $region55: #{tpu_custom_call.1} parent=5 // pred_region
        %s1097 = ssub.s32 %s16, 2
        // Predicated region
        $region57: #{tpu_custom_call.1} parent=55 // pred_check
          %p1098 = pneg %p176
        $region58: #{tpu_custom_call.1} parent=55 // pred_check_branch
          %1100 = sbr.rel (%p1098) target = $region60
        $region59: #{tpu_custom_call.1} parent=55 // pred_region
          %s1101 = sand.u32 %s161, 1
          %s1102 = scalar_lea.sflag [#allocation4], %s1101
          %s1103 = sand.u32 %s161, 1
          %s1104 = smul.addr %s1103, 8
          %s1105 = scalar_lea.vmem [#allocation5], %s1104
          %1106 = dma.done %s1102, 128
        $region60: #{tpu_custom_call.1} parent=55 // pred_fallthru
          _
      $region56: #{tpu_custom_call.1} parent=5 // pred_fallthru
        _
    $region6: #{tpu_custom_call.1} parent=1 // loop_footer
      %s20 = sadd.s32 1, %s16
    $region7: #{tpu_custom_call.1} parent=1 // loop_footer_branch
      %15 = sbr.rel target = $region3
    $region8: #{tpu_custom_call.1} parent=1 // loop_exit
      _
    %1107 = vsyncpa [#allocation3], 1
    %s1108 = scalar_lea.sflag [#allocation3], 1
    %1109 = vsyncpa %s1108, 1
    %1110 = vsyncpa [#allocation4], 1
    %s1111 = scalar_lea.sflag [#allocation4], 1
    %1112 = vsyncpa %s1111, 1

</llo_original>
